<compile_context>
chip_gen: v6e
topology: v6e:2x2x1
jax: 0.10.0
libtpu: 0.0.40
codegen_flags: <defaults>
</compile_context>

<pallas_src>
import functools

import jax
import jax.numpy as jnp
import numpy as np
from jax.experimental import pallas as pl
from jax.experimental.pallas import tpu as pltpu

EPS = 1e-5          # nn.InstanceNorm2d default eps
LRELU_SLOPE = 0.01  # nn.LeakyReLU default negative_slope


def _round_up(x, m):
    return (x + m - 1) // m * m


# -----------------------------------------------------------------------------
# pltpu.roll sign/availability probe (one tiny kernel, run once at setup).
# We need shifted[:, p] = x[:, (p + d) mod L]; with jnp.roll semantics that is
# roll(x, -d).  Probe the hardware rotate's convention instead of assuming it.
# -----------------------------------------------------------------------------
@functools.lru_cache(maxsize=None)
def _detect_roll_mode():
    """Returns "jnp" (roll(x,s)[i]==x[i-s]), "neg" (mirror), or "concat"."""
    try:
        probe_shift = 239   # > 128 so cross-vreg lane wrap is exercised too
        x = jnp.zeros((16, 256), jnp.bfloat16).at[0, 0].set(1)

        def k(x_ref, o_ref):
            o_ref[...] = pltpu.roll(x_ref[...], probe_shift, axis=1)

        out = pl.pallas_call(
            k, out_shape=jax.ShapeDtypeStruct((16, 256), jnp.bfloat16))(x)
        y = np.asarray(out.astype(jnp.float32))
        if y[0, probe_shift] == 1.0:
            return "jnp"
        if y[0, (-probe_shift) % 256] == 1.0:
            return "neg"
    except Exception:
        pass
    return "concat"   # slice+concatenate fallback (correct, more VALU work)


def _make_lane_shift(roll_mode, hw):
    """Returns shift(x, d) with shift(x, d)[:, p] == x[:, (p + d) mod hw]."""
    if roll_mode == "jnp":
        return lambda x, d: x if d % hw == 0 else pltpu.roll(x, (-d) % hw, axis=1)
    if roll_mode == "neg":
        return lambda x, d: x if d % hw == 0 else pltpu.roll(x, d % hw, axis=1)

    def shift(x, d):
        d %= hw
        if d == 0:
            return x
        return jnp.concatenate([x[:, d:], x[:, :d]], axis=1)
    return shift


# -----------------------------------------------------------------------------
# Kernel
# -----------------------------------------------------------------------------
def _instnorm_lrelu(y):
    """InstanceNorm2d(affine=False) + LeakyReLU on a (C, H*W) f32 tile.

    Single-pass statistics: sum and sum-of-squares reduced together (two
    independent XLU reductions instead of two dependent ones plus an extra
    centered-square VPU pass); rsqrt goes to the EUP slot.
    """
    inv_n = 1.0 / y.shape[-1]
    s1 = jnp.sum(y, axis=-1, keepdims=True)
    s2 = jnp.sum(y * y, axis=-1, keepdims=True)
    mean = s1 * inv_n
    var = s2 * inv_n - mean * mean                 # biased variance
    z = (y - mean) * jax.lax.rsqrt(var + EPS)
    return jnp.where(z >= 0, z, LRELU_SLOPE * z)


def _double_conv_kernel(x_ref, w1_ref, w2_ref, mask_ref, o_ref,
                        col1_ref, col2_ref, *, W, lane_shift):
    """Fused Conv3x3 -> IN -> LeakyReLU -> Conv3x3 -> IN -> LeakyReLU.

    Block shapes (one batch sample per grid step, channels padded to 16):
      x_ref    : (1, Ci_p, H*W)    f32
      w1_ref   : (Co_p, 9*Ci_p)    bf16   K index = tap*Ci_p + cin (tap-major)
      w2_ref   : (Co_p, 9*Co_p)    bf16
      mask_ref : (9, 1, H*W)       bf16   per-tap validity mask (zero padding)
      o_ref    : (1, Cout, H*W)    f32
      col1_ref : (9*Ci_p, H*W)     bf16   VMEM im2col scratch, conv1
      col2_ref : (9*Co_p, H*W)     bf16   VMEM im2col scratch, conv2
    """

    def conv3x3(a, w_ref, col_ref):
        # In-VMEM im2col: 9 lane-rotated (XLU) + masked (VPU, bf16) copies of
        # the activation, then ONE (Co_p, 9*C) @ (9*C, H*W) MXU matmul instead
        # of 9 skinny K=C matmuls with per-tap push/drain + f32 acc epilogues.
        c = a.shape[0]                        # padded channel count
        ab = a.astype(jnp.bfloat16)           # cast once per conv, not per tap
        # TODO(synk): on v5e (no bf16 VALU) keep `ab`/masks in f32 and cast the
        # finished im2col rows instead; on v6e/v7x bf16 halves the VPU work.
        for t in range(9):
            dy, dx = t // 3 - 1, t % 3 - 1
            shifted = lane_shift(ab, dy * W + dx)
            col_ref[t * c:(t + 1) * c, :] = shifted * mask_ref[t]
        return jnp.dot(w_ref[...], col_ref[...],
                       preferred_element_type=jnp.float32)

    x = x_ref[0]                                          # (Ci_p, H*W) f32
    h = _instnorm_lrelu(conv3x3(x, w1_ref, col1_ref))     # (Co_p, H*W) f32
    h = _instnorm_lrelu(conv3x3(h, w2_ref, col2_ref))     # (Co_p, H*W) f32
    o_ref[0] = h[:o_ref.shape[1]].astype(o_ref.dtype)


# -----------------------------------------------------------------------------
# Wrapper
# -----------------------------------------------------------------------------
def _tap_masks(H, W):
    """(9, 1, H*W) 0/1 masks; mask[t, 0, h*W + w] == 1 iff the tap input
    (h + t//3 - 1, w + t%3 - 1) lies inside the image (not zero padding)."""
    rows = np.arange(H)[:, None]
    cols = np.arange(W)[None, :]
    masks = []
    for t in range(9):
        dy, dx = t // 3 - 1, t % 3 - 1
        m = ((rows + dy >= 0) & (rows + dy < H) &
             (cols + dx >= 0) & (cols + dx < W))
        masks.append(m.reshape(1, H * W))
    # bf16 masks are exact 0/1 -> per-tap masking runs on the bf16 VALU.
    return jnp.asarray(np.stack(masks, 0), dtype=jnp.bfloat16)


def _pack_weights(w, cin_pad, cout_pad):
    """(Cout, Cin, 3, 3) -> (cout_pad, 9*cin_pad) bf16, K index = tap*cin_pad + cin.

    Zero-padded channels so every im2col tap group in the kernel is a whole
    bf16 packed tile (16 rows) -> aligned full-tile VMEM scratch stores."""
    cout, cin = w.shape[:2]
    w = jnp.pad(w, ((0, cout_pad - cout), (0, cin_pad - cin), (0, 0), (0, 0)))
    w = jnp.transpose(w.reshape(cout_pad, cin_pad, 9), (0, 2, 1))  # (Co,9,Ci)
    return w.reshape(cout_pad, 9 * cin_pad).astype(jnp.bfloat16)


def unet_double_conv(x, w1, w2, *, roll_mode=None):
    """x: (N, Cin, H, W) f32 NCHW; w1: (Cout, Cin, 3, 3); w2: (Cout, Cout, 3, 3).

    Conv biases are intentionally NOT used: a per-channel constant bias is
    exactly cancelled by the following InstanceNorm2d(affine=False).
    """
    if roll_mode is None:
        roll_mode = _detect_roll_mode()

    N, Cin, H, W = x.shape
    Cout = w1.shape[0]
    HW = H * W
    # Lane-dense stores / matmul N dim want H*W to be a multiple of 128.
    # TODO(synk): pad H*W up to a lane multiple in the wrapper for odd sizes.
    assert HW % 128 == 0, "H*W must be a multiple of 128"

    # Channel padding to the bf16 sublane packing (16): a (4, HW) bf16 tile
    # already occupies the same vregs as (16, HW), so this is free at runtime.
    ci_p = _round_up(Cin, 16)
    co_p = _round_up(Cout, 16)

    xf = jnp.pad(x.astype(jnp.float32).reshape(N, Cin, HW),
                 ((0, 0), (0, ci_p - Cin), (0, 0)))      # reshape+pad, no transpose
    w1m = _pack_weights(w1, ci_p, co_p)                  # (co_p, 9*ci_p) bf16
    w2m = _pack_weights(w2, co_p, co_p)                  # (co_p, 9*co_p) bf16
    masks = _tap_masks(H, W)                             # (9, 1, H*W)    bf16

    flops = 2 * N * HW * 9 * (Cin * Cout + Cout * Cout)
    bytes_accessed = (xf.size * 4 + w1m.size * 2 + w2m.size * 2 +
                      masks.size * 2 + N * Cout * HW * 4)
    cost = pl.CostEstimate(flops=flops, transcendentals=2 * N * Cout,
                           bytes_accessed=bytes_accessed)

    # Per-step footprint here is tiny (<1 MiB incl. both im2col scratches), so
    # one sample per grid step fits VMEM on every generation.
    # TODO(synk): for real UNet stages (large H*W / channels) add spatial (H)
    #   tiling with a halo exchange and pin vmem_limit_bytes; budget <=~8-12 MiB
    #   of f32 activations per step on v7x (64 MiB physical VMEM per TC).
    # TODO(synk): for small images + large batch, pack several samples into the
    #   lane axis ((C, B*H*W) blocks - the tap masks already zero cross-sample
    #   wrap) with segmented instance-norm reductions, keeping an even number
    #   of parallel grid steps so both v7x TensorCores stay busy.
    # Note: weights/masks have constant index_maps so the pipeline re-uses one
    #   buffer; an explicit single-buffer override is noise at these sizes.
    out = pl.pallas_call(
        functools.partial(_double_conv_kernel, W=W,
                          lane_shift=_make_lane_shift(roll_mode, HW)),
        out_shape=jax.ShapeDtypeStruct((N, Cout, HW), jnp.float32),
        grid=(N,),
        in_specs=[
            pl.BlockSpec((1, ci_p, HW), lambda n: (n, 0, 0)),
            pl.BlockSpec((co_p, 9 * ci_p), lambda n: (0, 0)),
            pl.BlockSpec((co_p, 9 * co_p), lambda n: (0, 0)),
            pl.BlockSpec((9, 1, HW), lambda n: (0, 0, 0)),
        ],
        out_specs=pl.BlockSpec((1, Cout, HW), lambda n: (n, 0, 0)),
        scratch_shapes=[
            pltpu.VMEM((9 * ci_p, HW), jnp.bfloat16),   # conv1 im2col scratch
            pltpu.VMEM((9 * co_p, HW), jnp.bfloat16),   # conv2 im2col scratch
        ],
        compiler_params=pltpu.CompilerParams(
            dimension_semantics=("parallel",),   # batch shards over v7x's 2 TCs
        ),
        cost_estimate=cost,
    )(xf, w1m, w2m, masks)
    return out.reshape(N, Cout, H, W)


# -----------------------------------------------------------------------------
# Pure-JAX f32 reference (matches the PyTorch module exactly, biases included)
# -----------------------------------------------------------------------------
def double_conv_reference(x, w1, b1, w2, b2):
    def conv(h, w, b):
        y = jax.lax.conv_general_dilated(
            h, w, window_strides=(1, 1), padding=((1, 1), (1, 1)),
            dimension_numbers=("NCHW", "OIHW", "NCHW"))
        return y + b[None, :, None, None]

    def inorm_lrelu(h):
        mean = jnp.mean(h, axis=(2, 3), keepdims=True)
        var = jnp.var(h, axis=(2, 3), keepdims=True)
        z = (h - mean) * jax.lax.rsqrt(var + EPS)
        return jnp.where(z >= 0, z, LRELU_SLOPE * z)

    return inorm_lrelu(conv(inorm_lrelu(conv(x, w1, b1)), w2, b2))


if __name__ == "__main__":
    IN_C, OUT_C = 4, 16
    N, H, W = 2, 16, 16

    key = jax.random.PRNGKey(0)
    k1, k2, k3, k4, kx = jax.random.split(key, 5)
    bound1 = 1.0 / (IN_C * 9) ** 0.5        # PyTorch Conv2d default init bounds
    w1 = jax.random.uniform(k1, (OUT_C, IN_C, 3, 3), jnp.float32, -bound1, bound1)
    b1 = jax.random.uniform(k2, (OUT_C,), jnp.float32, -bound1, bound1)
    bound2 = 1.0 / (OUT_C * 9) ** 0.5
    w2 = jax.random.uniform(k3, (OUT_C, OUT_C, 3, 3), jnp.float32, -bound2, bound2)
    b2 = jax.random.uniform(k4, (OUT_C,), jnp.float32, -bound2, bound2)
    x = jax.random.normal(kx, (N, IN_C, H, W), dtype=jnp.float32)

    roll_mode = _detect_roll_mode()          # one-time rotate sign/availability probe
    fwd = jax.jit(lambda xx: unet_double_conv(xx, w1, w2, roll_mode=roll_mode))
    y = fwd(x)
    jax.block_until_ready(y)
    assert y.shape == (N, OUT_C, H, W), y.shape

    ref = double_conv_reference(x, w1, b1, w2, b2)
    max_err = float(jnp.max(jnp.abs(y - ref)))
    # bf16 MXU operands / bf16 masking (f32 accumulation + f32 norm) vs. a pure
    # f32 reference on unit-variance outputs: expect ~1e-2 max abs error.
    # Tightened from 0.2 per review (catches tap/mask/shift-sign regressions).
    assert max_err < 5e-2, f"mismatch vs reference: max abs err = {max_err}"
    print("KERNEL_OK")
</pallas_src>

<mosaic_0001>
module attributes {stable_mosaic.version = 11 : i64} {
  func.func @k(%arg0: memref<16x256xbf16, #tpu.memory_space<vmem>>, %arg1: memref<16x256xbf16, #tpu.memory_space<vmem>>) attributes {dimension_semantics = [], scalar_prefetch = 0 : i64, scratch_operands = 0 : i64, tpu.core_type = #tpu.core_type<tc>} {
    %c0 = arith.constant 0 : index
    %c0_0 = arith.constant 0 : index
    %0 = vector.load %arg0[%c0, %c0_0] : memref<16x256xbf16, #tpu.memory_space<vmem>>, vector<16x256xbf16>
    %c239_i32 = arith.constant 239 : i32
    %1 = tpu.dynamic_rotate %0 by %c239_i32 dim 1 : vector<16x256xbf16>, i32 -> vector<16x256xbf16>
    %c0_1 = arith.constant 0 : index
    %c0_2 = arith.constant 0 : index
    %2 = vector.load %arg1[%c0_1, %c0_2] : memref<16x256xbf16, #tpu.memory_space<vmem>>, vector<16x256xbf16>
    tpu.vector_store %arg1[%c0_1, %c0_2], %1 {strides = array<i32>} : memref<16x256xbf16, #tpu.memory_space<vmem>>, vector<16x256xbf16>,
    return
  }
}

module attributes {stable_mosaic.version = 11 : i64} {
  func.func @_double_conv_kernel(%arg0: i32, %arg1: memref<1x16x256xf32, #tpu.memory_space<vmem>>, %arg2: memref<16x144xbf16, #tpu.memory_space<vmem>>, %arg3: memref<16x144xbf16, #tpu.memory_space<vmem>>, %arg4: memref<9x1x256xbf16, #tpu.memory_space<vmem>>, %arg5: memref<1x16x256xf32, #tpu.memory_space<vmem>>, %arg6: memref<144x256xbf16, #tpu.memory_space<vmem>>, %arg7: memref<144x256xbf16, #tpu.memory_space<vmem>>) attributes {dimension_semantics = [#tpu.dimension_semantics<parallel>], iteration_bounds = array<i64: 2>, scalar_prefetch = 0 : i64, scratch_operands = 2 : i64, tpu.core_type = #tpu.core_type<tc>, window_params = [{transform_indices = @transform_0, window_bounds = array<i64: 1, 16, 256>}, {pipeline_mode = #tpu.pipeline_mode<synchronous>, transform_indices = @transform_1, window_bounds = array<i64: 16, 144>}, {pipeline_mode = #tpu.pipeline_mode<synchronous>, transform_indices = @transform_2, window_bounds = array<i64: 16, 144>}, {pipeline_mode = #tpu.pipeline_mode<synchronous>, transform_indices = @transform_3, window_bounds = array<i64: 9, 1, 256>}, {transform_indices = @transform_4, window_bounds = array<i64: 1, 16, 256>}]} {
    %c0 = arith.constant 0 : index
    %c0_0 = arith.constant 0 : index
    %c0_1 = arith.constant 0 : index
    %0 = vector.load %arg1[%c0, %c0_0, %c0_1] : memref<1x16x256xf32, #tpu.memory_space<vmem>>, vector<1x16x256xf32>
    %1 = vector.shape_cast %0 : vector<1x16x256xf32> to vector<16x256xf32>
    %2 = arith.truncf %1 : vector<16x256xf32> to vector<16x256xbf16>
    %3 = vector.extract_strided_slice %2 {offsets = [0, 239], sizes = [16, 17], strides = [1, 1]} : vector<16x256xbf16> to vector<16x17xbf16>
    %4 = vector.extract_strided_slice %2 {offsets = [0, 0], sizes = [16, 239], strides = [1, 1]} : vector<16x256xbf16> to vector<16x239xbf16>
    %5 = tpu.concatenate %3, %4 in 1 : vector<16x17xbf16>, vector<16x239xbf16> -> vector<16x256xbf16>
    %c0_2 = arith.constant 0 : index
    %c0_3 = arith.constant 0 : index
    %c0_4 = arith.constant 0 : index
    %6 = vector.load %arg4[%c0_2, %c0_3, %c0_4] : memref<9x1x256xbf16, #tpu.memory_space<vmem>>, vector<1x1x256xbf16>
    %7 = vector.shape_cast %6 : vector<1x1x256xbf16> to vector<1x256xbf16>
    %8 = vector.broadcast %7 : vector<1x256xbf16> to vector<16x256xbf16>
    %9 = arith.mulf %5, %8 : vector<16x256xbf16>
    %c0_5 = arith.constant 0 : index
    %c0_6 = arith.constant 0 : index
    %10 = vector.load %arg6[%c0_5, %c0_6] : memref<144x256xbf16, #tpu.memory_space<vmem>>, vector<16x256xbf16>
    tpu.vector_store %arg6[%c0_5, %c0_6], %9 {strides = array<i32>} : memref<144x256xbf16, #tpu.memory_space<vmem>>, vector<16x256xbf16>,
    %11 = vector.extract_strided_slice %2 {offsets = [0, 240], sizes = [16, 16], strides = [1, 1]} : vector<16x256xbf16> to vector<16x16xbf16>
    %12 = vector.extract_strided_slice %2 {offsets = [0, 0], sizes = [16, 240], strides = [1, 1]} : vector<16x256xbf16> to vector<16x240xbf16>
    %13 = tpu.concatenate %11, %12 in 1 : vector<16x16xbf16>, vector<16x240xbf16> -> vector<16x256xbf16>
    %c1 = arith.constant 1 : index
    %c0_7 = arith.constant 0 : index
    %c0_8 = arith.constant 0 : index
    %14 = vector.load %arg4[%c1, %c0_7, %c0_8] : memref<9x1x256xbf16, #tpu.memory_space<vmem>>, vector<1x1x256xbf16>
    %15 = vector.shape_cast %14 : vector<1x1x256xbf16> to vector<1x256xbf16>
    %16 = vector.broadcast %15 : vector<1x256xbf16> to vector<16x256xbf16>
    %17 = arith.mulf %13, %16 : vector<16x256xbf16>
    %c16 = arith.constant 16 : index
    %c0_9 = arith.constant 0 : index
    %18 = vector.load %arg6[%c16, %c0_9] : memref<144x256xbf16, #tpu.memory_space<vmem>>, vector<16x256xbf16>
    tpu.vector_store %arg6[%c16, %c0_9], %17 {strides = array<i32>} : memref<144x256xbf16, #tpu.memory_space<vmem>>, vector<16x256xbf16>,
    %19 = vector.extract_strided_slice %2 {offsets = [0, 241], sizes = [16, 15], strides = [1, 1]} : vector<16x256xbf16> to vector<16x15xbf16>
    %20 = vector.extract_strided_slice %2 {offsets = [0, 0], sizes = [16, 241], strides = [1, 1]} : vector<16x256xbf16> to vector<16x241xbf16>
    %21 = tpu.concatenate %19, %20 in 1 : vector<16x15xbf16>, vector<16x241xbf16> -> vector<16x256xbf16>
    %c2 = arith.constant 2 : index
    %c0_10 = arith.constant 0 : index
    %c0_11 = arith.constant 0 : index
    %22 = vector.load %arg4[%c2, %c0_10, %c0_11] : memref<9x1x256xbf16, #tpu.memory_space<vmem>>, vector<1x1x256xbf16>
    %23 = vector.shape_cast %22 : vector<1x1x256xbf16> to vector<1x256xbf16>
    %24 = vector.broadcast %23 : vector<1x256xbf16> to vector<16x256xbf16>
    %25 = arith.mulf %21, %24 : vector<16x256xbf16>
    %c32 = arith.constant 32 : index
    %c0_12 = arith.constant 0 : index
    %26 = vector.load %arg6[%c32, %c0_12] : memref<144x256xbf16, #tpu.memory_space<vmem>>, vector<16x256xbf16>
    tpu.vector_store %arg6[%c32, %c0_12], %25 {strides = array<i32>} : memref<144x256xbf16, #tpu.memory_space<vmem>>, vector<16x256xbf16>,
    %27 = vector.extract_strided_slice %2 {offsets = [0, 255], sizes = [16, 1], strides = [1, 1]} : vector<16x256xbf16> to vector<16x1xbf16>
    %28 = vector.extract_strided_slice %2 {offsets = [0, 0], sizes = [16, 255], strides = [1, 1]} : vector<16x256xbf16> to vector<16x255xbf16>
    %29 = tpu.concatenate %27, %28 in 1 : vector<16x1xbf16>, vector<16x255xbf16> -> vector<16x256xbf16>
    %c3 = arith.constant 3 : index
    %c0_13 = arith.constant 0 : index
    %c0_14 = arith.constant 0 : index
    %30 = vector.load %arg4[%c3, %c0_13, %c0_14] : memref<9x1x256xbf16, #tpu.memory_space<vmem>>, vector<1x1x256xbf16>
    %31 = vector.shape_cast %30 : vector<1x1x256xbf16> to vector<1x256xbf16>
    %32 = vector.broadcast %31 : vector<1x256xbf16> to vector<16x256xbf16>
    %33 = arith.mulf %29, %32 : vector<16x256xbf16>
    %c48 = arith.constant 48 : index
    %c0_15 = arith.constant 0 : index
    %34 = vector.load %arg6[%c48, %c0_15] : memref<144x256xbf16, #tpu.memory_space<vmem>>, vector<16x256xbf16>
    tpu.vector_store %arg6[%c48, %c0_15], %33 {strides = array<i32>} : memref<144x256xbf16, #tpu.memory_space<vmem>>, vector<16x256xbf16>,
    %c4 = arith.constant 4 : index
    %c0_16 = arith.constant 0 : index
    %c0_17 = arith.constant 0 : index
    %35 = vector.load %arg4[%c4, %c0_16, %c0_17] : memref<9x1x256xbf16, #tpu.memory_space<vmem>>, vector<1x1x256xbf16>
    %36 = vector.shape_cast %35 : vector<1x1x256xbf16> to vector<1x256xbf16>
    %37 = vector.broadcast %36 : vector<1x256xbf16> to vector<16x256xbf16>
    %38 = arith.mulf %2, %37 : vector<16x256xbf16>
    %c64 = arith.constant 64 : index
    %c0_18 = arith.constant 0 : index
    %39 = vector.load %arg6[%c64, %c0_18] : memref<144x256xbf16, #tpu.memory_space<vmem>>, vector<16x256xbf16>
    tpu.vector_store %arg6[%c64, %c0_18], %38 {strides = array<i32>} : memref<144x256xbf16, #tpu.memory_space<vmem>>, vector<16x256xbf16>,
    %40 = vector.extract_strided_slice %2 {offsets = [0, 1], sizes = [16, 255], strides = [1, 1]} : vector<16x256xbf16> to vector<16x255xbf16>
    %41 = vector.extract_strided_slice %2 {offsets = [0, 0], sizes = [16, 1], strides = [1, 1]} : vector<16x256xbf16> to vector<16x1xbf16>
    %42 = tpu.concatenate %40, %41 in 1 : vector<16x255xbf16>, vector<16x1xbf16> -> vector<16x256xbf16>
    %c5 = arith.constant 5 : index
    %c0_19 = arith.constant 0 : index
    %c0_20 = arith.constant 0 : index
    %43 = vector.load %arg4[%c5, %c0_19, %c0_20] : memref<9x1x256xbf16, #tpu.memory_space<vmem>>, vector<1x1x256xbf16>
    %44 = vector.shape_cast %43 : vector<1x1x256xbf16> to vector<1x256xbf16>
    %45 = vector.broadcast %44 : vector<1x256xbf16> to vector<16x256xbf16>
    %46 = arith.mulf %42, %45 : vector<16x256xbf16>
    %c80 = arith.constant 80 : index
    %c0_21 = arith.constant 0 : index
    %47 = vector.load %arg6[%c80, %c0_21] : memref<144x256xbf16, #tpu.memory_space<vmem>>, vector<16x256xbf16>
    tpu.vector_store %arg6[%c80, %c0_21], %46 {strides = array<i32>} : memref<144x256xbf16, #tpu.memory_space<vmem>>, vector<16x256xbf16>,
    %48 = vector.extract_strided_slice %2 {offsets = [0, 15], sizes = [16, 241], strides = [1, 1]} : vector<16x256xbf16> to vector<16x241xbf16>
    %49 = vector.extract_strided_slice %2 {offsets = [0, 0], sizes = [16, 15], strides = [1, 1]} : vector<16x256xbf16> to vector<16x15xbf16>
    %50 = tpu.concatenate %48, %49 in 1 : vector<16x241xbf16>, vector<16x15xbf16> -> vector<16x256xbf16>
    %c6 = arith.constant 6 : index
    %c0_22 = arith.constant 0 : index
    %c0_23 = arith.constant 0 : index
    %51 = vector.load %arg4[%c6, %c0_22, %c0_23] : memref<9x1x256xbf16, #tpu.memory_space<vmem>>, vector<1x1x256xbf16>
    %52 = vector.shape_cast %51 : vector<1x1x256xbf16> to vector<1x256xbf16>
    %53 = vector.broadcast %52 : vector<1x256xbf16> to vector<16x256xbf16>
    %54 = arith.mulf %50, %53 : vector<16x256xbf16>
    %c96 = arith.constant 96 : index
    %c0_24 = arith.constant 0 : index
    %55 = vector.load %arg6[%c96, %c0_24] : memref<144x256xbf16, #tpu.memory_space<vmem>>, vector<16x256xbf16>
    tpu.vector_store %arg6[%c96, %c0_24], %54 {strides = array<i32>} : memref<144x256xbf16, #tpu.memory_space<vmem>>, vector<16x256xbf16>,
    %56 = vector.extract_strided_slice %2 {offsets = [0, 16], sizes = [16, 240], strides = [1, 1]} : vector<16x256xbf16> to vector<16x240xbf16>
    %57 = vector.extract_strided_slice %2 {offsets = [0, 0], sizes = [16, 16], strides = [1, 1]} : vector<16x256xbf16> to vector<16x16xbf16>
    %58 = tpu.concatenate %56, %57 in 1 : vector<16x240xbf16>, vector<16x16xbf16> -> vector<16x256xbf16>
    %c7 = arith.constant 7 : index
    %c0_25 = arith.constant 0 : index
    %c0_26 = arith.constant 0 : index
    %59 = vector.load %arg4[%c7, %c0_25, %c0_26] : memref<9x1x256xbf16, #tpu.memory_space<vmem>>, vector<1x1x256xbf16>
    %60 = vector.shape_cast %59 : vector<1x1x256xbf16> to vector<1x256xbf16>
    %61 = vector.broadcast %60 : vector<1x256xbf16> to vector<16x256xbf16>
    %62 = arith.mulf %58, %61 : vector<16x256xbf16>
    %c112 = arith.constant 112 : index
    %c0_27 = arith.constant 0 : index
    %63 = vector.load %arg6[%c112, %c0_27] : memref<144x256xbf16, #tpu.memory_space<vmem>>, vector<16x256xbf16>
    tpu.vector_store %arg6[%c112, %c0_27], %62 {strides = array<i32>} : memref<144x256xbf16, #tpu.memory_space<vmem>>, vector<16x256xbf16>,
    %64 = vector.extract_strided_slice %2 {offsets = [0, 17], sizes = [16, 239], strides = [1, 1]} : vector<16x256xbf16> to vector<16x239xbf16>
    %65 = vector.extract_strided_slice %2 {offsets = [0, 0], sizes = [16, 17], strides = [1, 1]} : vector<16x256xbf16> to vector<16x17xbf16>
    %66 = tpu.concatenate %64, %65 in 1 : vector<16x239xbf16>, vector<16x17xbf16> -> vector<16x256xbf16>
    %c8 = arith.constant 8 : index
    %c0_28 = arith.constant 0 : index
    %c0_29 = arith.constant 0 : index
    %67 = vector.load %arg4[%c8, %c0_28, %c0_29] : memref<9x1x256xbf16, #tpu.memory_space<vmem>>, vector<1x1x256xbf16>
    %68 = vector.shape_cast %67 : vector<1x1x256xbf16> to vector<1x256xbf16>
    %69 = vector.broadcast %68 : vector<1x256xbf16> to vector<16x256xbf16>
    %70 = arith.mulf %66, %69 : vector<16x256xbf16>
    %c128 = arith.constant 128 : index
    %c0_30 = arith.constant 0 : index
    %71 = vector.load %arg6[%c128, %c0_30] : memref<144x256xbf16, #tpu.memory_space<vmem>>, vector<16x256xbf16>
    tpu.vector_store %arg6[%c128, %c0_30], %70 {strides = array<i32>} : memref<144x256xbf16, #tpu.memory_space<vmem>>, vector<16x256xbf16>,
    %c0_31 = arith.constant 0 : index
    %c0_32 = arith.constant 0 : index
    %72 = vector.load %arg2[%c0_31, %c0_32] : memref<16x144xbf16, #tpu.memory_space<vmem>>, vector<16x144xbf16>
    %c0_33 = arith.constant 0 : index
    %c0_34 = arith.constant 0 : index
    %73 = vector.load %arg6[%c0_33, %c0_34] : memref<144x256xbf16, #tpu.memory_space<vmem>>, vector<144x256xbf16>
    %cst = arith.constant dense<0.000000e+00> : vector<16x256xf32>
    %74 = tpu.matmul %72, %73, %cst {dimension_numbers = #tpu.dot_dimension_numbers<[1], [0], [0], [1], [0, 0, 1, 1], [], []>} : vector<16x144xbf16>, vector<144x256xbf16>, vector<16x256xf32> -> vector<16x256xf32>
    %cst_35 = arith.constant dense<0.000000e+00> : vector<16xf32>
    %75 = vector.multi_reduction <add>, %74, %cst_35 [1] : vector<16x256xf32> to vector<16xf32>
    %76 = vector.shape_cast %75 : vector<16xf32> to vector<16x1xf32>
    %77 = arith.mulf %74, %74 : vector<16x256xf32>
    %cst_36 = arith.constant dense<0.000000e+00> : vector<16xf32>
    %78 = vector.multi_reduction <add>, %77, %cst_36 [1] : vector<16x256xf32> to vector<16xf32>
    %79 = vector.shape_cast %78 : vector<16xf32> to vector<16x1xf32>
    %cst_37 = arith.constant 3.906250e-03 : f32
    %80 = vector.broadcast %cst_37 : f32 to vector<16x1xf32>
    %81 = arith.mulf %76, %80 : vector<16x1xf32>
    %cst_38 = arith.constant 3.906250e-03 : f32
    %82 = vector.broadcast %cst_38 : f32 to vector<16x1xf32>
    %83 = arith.mulf %79, %82 : vector<16x1xf32>
    %84 = arith.mulf %81, %81 : vector<16x1xf32>
    %85 = arith.subf %83, %84 : vector<16x1xf32>
    %86 = vector.broadcast %81 : vector<16x1xf32> to vector<16x256xf32>
    %87 = arith.subf %74, %86 : vector<16x256xf32>
    %cst_39 = arith.constant 9.99999974E-6 : f32
    %88 = vector.broadcast %cst_39 : f32 to vector<16x1xf32>
    %89 = arith.addf %85, %88 : vector<16x1xf32>
    %90 = math.rsqrt %89 : vector<16x1xf32>
    %91 = vector.broadcast %90 : vector<16x1xf32> to vector<16x256xf32>
    %92 = arith.mulf %87, %91 : vector<16x256xf32>
    %cst_40 = arith.constant 0.000000e+00 : f32
    %93 = vector.broadcast %cst_40 : f32 to vector<16x256xf32>
    %94 = arith.cmpf oge, %92, %93 : vector<16x256xf32>
    %cst_41 = arith.constant 0.00999999977 : f32
    %95 = vector.broadcast %cst_41 : f32 to vector<16x256xf32>
    %96 = arith.mulf %95, %92 : vector<16x256xf32>
    %97 = arith.select %94, %92, %96 : vector<16x256xi1>, vector<16x256xf32>
    %98 = arith.truncf %97 : vector<16x256xf32> to vector<16x256xbf16>
    %99 = vector.extract_strided_slice %98 {offsets = [0, 239], sizes = [16, 17], strides = [1, 1]} : vector<16x256xbf16> to vector<16x17xbf16>
    %100 = vector.extract_strided_slice %98 {offsets = [0, 0], sizes = [16, 239], strides = [1, 1]} : vector<16x256xbf16> to vector<16x239xbf16>
    %101 = tpu.concatenate %99, %100 in 1 : vector<16x17xbf16>, vector<16x239xbf16> -> vector<16x256xbf16>
    %c0_42 = arith.constant 0 : index
    %c0_43 = arith.constant 0 : index
    %c0_44 = arith.constant 0 : index
    %102 = vector.load %arg4[%c0_42, %c0_43, %c0_44] : memref<9x1x256xbf16, #tpu.memory_space<vmem>>, vector<1x1x256xbf16>
    %103 = vector.shape_cast %102 : vector<1x1x256xbf16> to vector<1x256xbf16>
    %104 = vector.broadcast %103 : vector<1x256xbf16> to vector<16x256xbf16>
    %105 = arith.mulf %101, %104 : vector<16x256xbf16>
    %c0_45 = arith.constant 0 : index
    %c0_46 = arith.constant 0 : index
    %106 = vector.load %arg7[%c0_45, %c0_46] : memref<144x256xbf16, #tpu.memory_space<vmem>>, vector<16x256xbf16>
    tpu.vector_store %arg7[%c0_45, %c0_46], %105 {strides = array<i32>} : memref<144x256xbf16, #tpu.memory_space<vmem>>, vector<16x256xbf16>,
    %107 = vector.extract_strided_slice %98 {offsets = [0, 240], sizes = [16, 16], strides = [1, 1]} : vector<16x256xbf16> to vector<16x16xbf16>
    %108 = vector.extract_strided_slice %98 {offsets = [0, 0], sizes = [16, 240], strides = [1, 1]} : vector<16x256xbf16> to vector<16x240xbf16>
    %109 = tpu.concatenate %107, %108 in 1 : vector<16x16xbf16>, vector<16x240xbf16> -> vector<16x256xbf16>
    %c1_47 = arith.constant 1 : index
    %c0_48 = arith.constant 0 : index
    %c0_49 = arith.constant 0 : index
    %110 = vector.load %arg4[%c1_47, %c0_48, %c0_49] : memref<9x1x256xbf16, #tpu.memory_space<vmem>>, vector<1x1x256xbf16>
    %111 = vector.shape_cast %110 : vector<1x1x256xbf16> to vector<1x256xbf16>
    %112 = vector.broadcast %111 : vector<1x256xbf16> to vector<16x256xbf16>
    %113 = arith.mulf %109, %112 : vector<16x256xbf16>
    %c16_50 = arith.constant 16 : index
    %c0_51 = arith.constant 0 : index
    %114 = vector.load %arg7[%c16_50, %c0_51] : memref<144x256xbf16, #tpu.memory_space<vmem>>, vector<16x256xbf16>
    tpu.vector_store %arg7[%c16_50, %c0_51], %113 {strides = array<i32>} : memref<144x256xbf16, #tpu.memory_space<vmem>>, vector<16x256xbf16>,
    %115 = vector.extract_strided_slice %98 {offsets = [0, 241], sizes = [16, 15], strides = [1, 1]} : vector<16x256xbf16> to vector<16x15xbf16>
    %116 = vector.extract_strided_slice %98 {offsets = [0, 0], sizes = [16, 241], strides = [1, 1]} : vector<16x256xbf16> to vector<16x241xbf16>
    %117 = tpu.concatenate %115, %116 in 1 : vector<16x15xbf16>, vector<16x241xbf16> -> vector<16x256xbf16>
    %c2_52 = arith.constant 2 : index
    %c0_53 = arith.constant 0 : index
    %c0_54 = arith.constant 0 : index
    %118 = vector.load %arg4[%c2_52, %c0_53, %c0_54] : memref<9x1x256xbf16, #tpu.memory_space<vmem>>, vector<1x1x256xbf16>
    %119 = vector.shape_cast %118 : vector<1x1x256xbf16> to vector<1x256xbf16>
    %120 = vector.broadcast %119 : vector<1x256xbf16> to vector<16x256xbf16>
    %121 = arith.mulf %117, %120 : vector<16x256xbf16>
    %c32_55 = arith.constant 32 : index
    %c0_56 = arith.constant 0 : index
    %122 = vector.load %arg7[%c32_55, %c0_56] : memref<144x256xbf16, #tpu.memory_space<vmem>>, vector<16x256xbf16>
    tpu.vector_store %arg7[%c32_55, %c0_56], %121 {strides = array<i32>} : memref<144x256xbf16, #tpu.memory_space<vmem>>, vector<16x256xbf16>,
    %123 = vector.extract_strided_slice %98 {offsets = [0, 255], sizes = [16, 1], strides = [1, 1]} : vector<16x256xbf16> to vector<16x1xbf16>
    %124 = vector.extract_strided_slice %98 {offsets = [0, 0], sizes = [16, 255], strides = [1, 1]} : vector<16x256xbf16> to vector<16x255xbf16>
    %125 = tpu.concatenate %123, %124 in 1 : vector<16x1xbf16>, vector<16x255xbf16> -> vector<16x256xbf16>
    %c3_57 = arith.constant 3 : index
    %c0_58 = arith.constant 0 : index
    %c0_59 = arith.constant 0 : index
    %126 = vector.load %arg4[%c3_57, %c0_58, %c0_59] : memref<9x1x256xbf16, #tpu.memory_space<vmem>>, vector<1x1x256xbf16>
    %127 = vector.shape_cast %126 : vector<1x1x256xbf16> to vector<1x256xbf16>
    %128 = vector.broadcast %127 : vector<1x256xbf16> to vector<16x256xbf16>
    %129 = arith.mulf %125, %128 : vector<16x256xbf16>
    %c48_60 = arith.constant 48 : index
    %c0_61 = arith.constant 0 : index
    %130 = vector.load %arg7[%c48_60, %c0_61] : memref<144x256xbf16, #tpu.memory_space<vmem>>, vector<16x256xbf16>
    tpu.vector_store %arg7[%c48_60, %c0_61], %129 {strides = array<i32>} : memref<144x256xbf16, #tpu.memory_space<vmem>>, vector<16x256xbf16>,
    %c4_62 = arith.constant 4 : index
    %c0_63 = arith.constant 0 : index
    %c0_64 = arith.constant 0 : index
    %131 = vector.load %arg4[%c4_62, %c0_63, %c0_64] : memref<9x1x256xbf16, #tpu.memory_space<vmem>>, vector<1x1x256xbf16>
    %132 = vector.shape_cast %131 : vector<1x1x256xbf16> to vector<1x256xbf16>
    %133 = vector.broadcast %132 : vector<1x256xbf16> to vector<16x256xbf16>
    %134 = arith.mulf %98, %133 : vector<16x256xbf16>
    %c64_65 = arith.constant 64 : index
    %c0_66 = arith.constant 0 : index
    %135 = vector.load %arg7[%c64_65, %c0_66] : memref<144x256xbf16, #tpu.memory_space<vmem>>, vector<16x256xbf16>
    tpu.vector_store %arg7[%c64_65, %c0_66], %134 {strides = array<i32>} : memref<144x256xbf16, #tpu.memory_space<vmem>>, vector<16x256xbf16>,
    %136 = vector.extract_strided_slice %98 {offsets = [0, 1], sizes = [16, 255], strides = [1, 1]} : vector<16x256xbf16> to vector<16x255xbf16>
    %137 = vector.extract_strided_slice %98 {offsets = [0, 0], sizes = [16, 1], strides = [1, 1]} : vector<16x256xbf16> to vector<16x1xbf16>
    %138 = tpu.concatenate %136, %137 in 1 : vector<16x255xbf16>, vector<16x1xbf16> -> vector<16x256xbf16>
    %c5_67 = arith.constant 5 : index
    %c0_68 = arith.constant 0 : index
    %c0_69 = arith.constant 0 : index
    %139 = vector.load %arg4[%c5_67, %c0_68, %c0_69] : memref<9x1x256xbf16, #tpu.memory_space<vmem>>, vector<1x1x256xbf16>
    %140 = vector.shape_cast %139 : vector<1x1x256xbf16> to vector<1x256xbf16>
    %141 = vector.broadcast %140 : vector<1x256xbf16> to vector<16x256xbf16>
    %142 = arith.mulf %138, %141 : vector<16x256xbf16>
    %c80_70 = arith.constant 80 : index
    %c0_71 = arith.constant 0 : index
    %143 = vector.load %arg7[%c80_70, %c0_71] : memref<144x256xbf16, #tpu.memory_space<vmem>>, vector<16x256xbf16>
    tpu.vector_store %arg7[%c80_70, %c0_71], %142 {strides = array<i32>} : memref<144x256xbf16, #tpu.memory_space<vmem>>, vector<16x256xbf16>,
    %144 = vector.extract_strided_slice %98 {offsets = [0, 15], sizes = [16, 241], strides = [1, 1]} : vector<16x256xbf16> to vector<16x241xbf16>
    %145 = vector.extract_strided_slice %98 {offsets = [0, 0], sizes = [16, 15], strides = [1, 1]} : vector<16x256xbf16> to vector<16x15xbf16>
    %146 = tpu.concatenate %144, %145 in 1 : vector<16x241xbf16>, vector<16x15xbf16> -> vector<16x256xbf16>
    %c6_72 = arith.constant 6 : index
    %c0_73 = arith.constant 0 : index
    %c0_74 = arith.constant 0 : index
    %147 = vector.load %arg4[%c6_72, %c0_73, %c0_74] : memref<9x1x256xbf16, #tpu.memory_space<vmem>>, vector<1x1x256xbf16>
    %148 = vector.shape_cast %147 : vector<1x1x256xbf16> to vector<1x256xbf16>
    %149 = vector.broadcast %148 : vector<1x256xbf16> to vector<16x256xbf16>
    %150 = arith.mulf %146, %149 : vector<16x256xbf16>
    %c96_75 = arith.constant 96 : index
    %c0_76 = arith.constant 0 : index
    %151 = vector.load %arg7[%c96_75, %c0_76] : memref<144x256xbf16, #tpu.memory_space<vmem>>, vector<16x256xbf16>
    tpu.vector_store %arg7[%c96_75, %c0_76], %150 {strides = array<i32>} : memref<144x256xbf16, #tpu.memory_space<vmem>>, vector<16x256xbf16>,
    %152 = vector.extract_strided_slice %98 {offsets = [0, 16], sizes = [16, 240], strides = [1, 1]} : vector<16x256xbf16> to vector<16x240xbf16>
    %153 = vector.extract_strided_slice %98 {offsets = [0, 0], sizes = [16, 16], strides = [1, 1]} : vector<16x256xbf16> to vector<16x16xbf16>
    %154 = tpu.concatenate %152, %153 in 1 : vector<16x240xbf16>, vector<16x16xbf16> -> vector<16x256xbf16>
    %c7_77 = arith.constant 7 : index
    %c0_78 = arith.constant 0 : index
    %c0_79 = arith.constant 0 : index
    %155 = vector.load %arg4[%c7_77, %c0_78, %c0_79] : memref<9x1x256xbf16, #tpu.memory_space<vmem>>, vector<1x1x256xbf16>
    %156 = vector.shape_cast %155 : vector<1x1x256xbf16> to vector<1x256xbf16>
    %157 = vector.broadcast %156 : vector<1x256xbf16> to vector<16x256xbf16>
    %158 = arith.mulf %154, %157 : vector<16x256xbf16>
    %c112_80 = arith.constant 112 : index
    %c0_81 = arith.constant 0 : index
    %159 = vector.load %arg7[%c112_80, %c0_81] : memref<144x256xbf16, #tpu.memory_space<vmem>>, vector<16x256xbf16>
    tpu.vector_store %arg7[%c112_80, %c0_81], %158 {strides = array<i32>} : memref<144x256xbf16, #tpu.memory_space<vmem>>, vector<16x256xbf16>,
    %160 = vector.extract_strided_slice %98 {offsets = [0, 17], sizes = [16, 239], strides = [1, 1]} : vector<16x256xbf16> to vector<16x239xbf16>
    %161 = vector.extract_strided_slice %98 {offsets = [0, 0], sizes = [16, 17], strides = [1, 1]} : vector<16x256xbf16> to vector<16x17xbf16>
    %162 = tpu.concatenate %160, %161 in 1 : vector<16x239xbf16>, vector<16x17xbf16> -> vector<16x256xbf16>
    %c8_82 = arith.constant 8 : index
    %c0_83 = arith.constant 0 : index
    %c0_84 = arith.constant 0 : index
    %163 = vector.load %arg4[%c8_82, %c0_83, %c0_84] : memref<9x1x256xbf16, #tpu.memory_space<vmem>>, vector<1x1x256xbf16>
    %164 = vector.shape_cast %163 : vector<1x1x256xbf16> to vector<1x256xbf16>
    %165 = vector.broadcast %164 : vector<1x256xbf16> to vector<16x256xbf16>
    %166 = arith.mulf %162, %165 : vector<16x256xbf16>
    %c128_85 = arith.constant 128 : index
    %c0_86 = arith.constant 0 : index
    %167 = vector.load %arg7[%c128_85, %c0_86] : memref<144x256xbf16, #tpu.memory_space<vmem>>, vector<16x256xbf16>
    tpu.vector_store %arg7[%c128_85, %c0_86], %166 {strides = array<i32>} : memref<144x256xbf16, #tpu.memory_space<vmem>>, vector<16x256xbf16>,
    %c0_87 = arith.constant 0 : index
    %c0_88 = arith.constant 0 : index
    %168 = vector.load %arg3[%c0_87, %c0_88] : memref<16x144xbf16, #tpu.memory_space<vmem>>, vector<16x144xbf16>
    %c0_89 = arith.constant 0 : index
    %c0_90 = arith.constant 0 : index
    %169 = vector.load %arg7[%c0_89, %c0_90] : memref<144x256xbf16, #tpu.memory_space<vmem>>, vector<144x256xbf16>
    %cst_91 = arith.constant dense<0.000000e+00> : vector<16x256xf32>
    %170 = tpu.matmul %168, %169, %cst_91 {dimension_numbers = #tpu.dot_dimension_numbers<[1], [0], [0], [1], [0, 0, 1, 1], [], []>} : vector<16x144xbf16>, vector<144x256xbf16>, vector<16x256xf32> -> vector<16x256xf32>
    %cst_92 = arith.constant dense<0.000000e+00> : vector<16xf32>
    %171 = vector.multi_reduction <add>, %170, %cst_92 [1] : vector<16x256xf32> to vector<16xf32>
    %172 = vector.shape_cast %171 : vector<16xf32> to vector<16x1xf32>
    %173 = arith.mulf %170, %170 : vector<16x256xf32>
    %cst_93 = arith.constant dense<0.000000e+00> : vector<16xf32>
    %174 = vector.multi_reduction <add>, %173, %cst_93 [1] : vector<16x256xf32> to vector<16xf32>
    %175 = vector.shape_cast %174 : vector<16xf32> to vector<16x1xf32>
    %cst_94 = arith.constant 3.906250e-03 : f32
    %176 = vector.broadcast %cst_94 : f32 to vector<16x1xf32>
    %177 = arith.mulf %172, %176 : vector<16x1xf32>
    %cst_95 = arith.constant 3.906250e-03 : f32
    %178 = vector.broadcast %cst_95 : f32 to vector<16x1xf32>
    %179 = arith.mulf %175, %178 : vector<16x1xf32>
    %180 = arith.mulf %177, %177 : vector<16x1xf32>
    %181 = arith.subf %179, %180 : vector<16x1xf32>
    %182 = vector.broadcast %177 : vector<16x1xf32> to vector<16x256xf32>
    %183 = arith.subf %170, %182 : vector<16x256xf32>
    %cst_96 = arith.constant 9.99999974E-6 : f32
    %184 = vector.broadcast %cst_96 : f32 to vector<16x1xf32>
    %185 = arith.addf %181, %184 : vector<16x1xf32>
    %186 = math.rsqrt %185 : vector<16x1xf32>
    %187 = vector.broadcast %186 : vector<16x1xf32> to vector<16x256xf32>
    %188 = arith.mulf %183, %187 : vector<16x256xf32>
    %cst_97 = arith.constant 0.000000e+00 : f32
    %189 = vector.broadcast %cst_97 : f32 to vector<16x256xf32>
    %190 = arith.cmpf oge, %188, %189 : vector<16x256xf32>
    %cst_98 = arith.constant 0.00999999977 : f32
    %191 = vector.broadcast %cst_98 : f32 to vector<16x256xf32>
    %192 = arith.mulf %191, %188 : vector<16x256xf32>
    %193 = arith.select %190, %188, %192 : vector<16x256xi1>, vector<16x256xf32>
    %c0_99 = arith.constant 0 : index
    %c0_100 = arith.constant 0 : index
    %c0_101 = arith.constant 0 : index
    %194 = vector.load %arg5[%c0_99, %c0_100, %c0_101] : memref<1x16x256xf32, #tpu.memory_space<vmem>>, vector<1x16x256xf32>
    %195 = vector.shape_cast %194 : vector<1x16x256xf32> to vector<16x256xf32>
    %196 = vector.shape_cast %193 : vector<16x256xf32> to vector<1x16x256xf32>
    tpu.vector_store %arg5[%c0_99, %c0_100, %c0_101], %196 {strides = array<i32>} : memref<1x16x256xf32, #tpu.memory_space<vmem>>, vector<1x16x256xf32>,
    return
  }
  func.func @transform_0(%arg0: i32) -> (i32, i32, i32) {
    %c0_i32 = arith.constant 0 : i32
    %c0_i32_0 = arith.constant 0 : i32
    %c0_i32_1 = arith.constant 0 : i32
    return %arg0, %c0_i32, %c0_i32_0 : i32, i32, i32
  }
  func.func @transform_1(%arg0: i32) -> (i32, i32) {
    %c0_i32 = arith.constant 0 : i32
    %c0_i32_0 = arith.constant 0 : i32
    %c0_i32_1 = arith.constant 0 : i32
    return %c0_i32, %c0_i32_0 : i32, i32
  }
  func.func @transform_2(%arg0: i32) -> (i32, i32) {
    %c0_i32 = arith.constant 0 : i32
    %c0_i32_0 = arith.constant 0 : i32
    %c0_i32_1 = arith.constant 0 : i32
    return %c0_i32, %c0_i32_0 : i32, i32
  }
  func.func @transform_3(%arg0: i32) -> (i32, i32, i32) {
    %c0_i32 = arith.constant 0 : i32
    %c0_i32_0 = arith.constant 0 : i32
    %c0_i32_1 = arith.constant 0 : i32
    %c0_i32_2 = arith.constant 0 : i32
    return %c0_i32, %c0_i32_0, %c0_i32_1 : i32, i32, i32
  }
  func.func @transform_4(%arg0: i32) -> (i32, i32, i32) {
    %c0_i32 = arith.constant 0 : i32
    %c0_i32_0 = arith.constant 0 : i32
    %c0_i32_1 = arith.constant 0 : i32
    return %arg0, %c0_i32, %c0_i32_0 : i32, i32, i32
  }
}

</mosaic_0001>

<llo_original>
// kernel: _lambda_.1
$region0: #{_lambda_.1}
  #allocation0 [shape = 'u32[]', space=smem, size = 0x4, offset = 0x4, fixed_abs, tag = 'smem constant byte address 0x4 - core index']
  #allocation1 [shape = 'u32[144,128]{1,0:T(1,128)}', space=vmem, size = 0x12000, scoped, tag = 'internal scratch']
  #allocation2 [shape = 'bf16[144,256]{1,0:T(8,128)(2,1)}', space=vmem, size = 0x12000, scoped, tag = 'scratch operand']
  #allocation3 [shape = 'bf16[144,256]{1,0:T(8,128)(2,1)}', space=vmem, size = 0x12000, scoped, tag = 'scratch operand']
  %s0 = inlined_call_operand.vmem [shape: f32[2,16,256], index: 0, kind: input, shape index: {}]
  %s1 = inlined_call_operand.vmem [shape: bf16[16,144], index: 1, kind: input, shape index: {}]
  %s2 = inlined_call_operand.vmem [shape: bf16[16,144], index: 2, kind: input, shape index: {}]
  %s3 = inlined_call_operand.vmem [shape: bf16[9,1,256], index: 3, kind: input, shape index: {}]
  %s4 = inlined_call_operand.vmem [shape: f32[2,16,256], index: 4, kind: output, shape index: {}]
  %s5 = sld [smem:[#allocation0]]
  $region49: #{_lambda_.1} parent=0
    _
  %s7 = ssub.s32 1, %s5
  %s8 = scalar_select 0, %s7, %s5
  loop: start=0, step=1, limit=4
  $region2: #{_lambda_.1} parent=0 // loop_pre_header
    _
  $region3: #{_lambda_.1} parent=0 // loop_header
    %s10 = sphi 0, %s14
    %p11 = scmp.ge.s32.totalorder %s10, 4
    %s20 = sphi 0, %s22
    %s23 = sphi 0, %s20
    %s24 = sphi 0, %s23
    %s40 = sphi 0, %s24
    %s44 = sphi 0, %s44
    %s46 = sphi 0, %s44
    %s47 = sphi 0, %s46
    %s61 = sphi 0, %s47
    %s65 = sphi 0, %s65
    %s67 = sphi 0, %s65
    %s68 = sphi 0, %s67
    %s82 = sphi 0, %s68
    %s86 = sphi 0, %s86
    %s88 = sphi 0, %s86
    %s89 = sphi 0, %s88
    %s103 = sphi 0, %s89
    %s109 = sphi 0, %s111
    %s112 = sphi 0, %s109
    %s113 = sphi 0, %s112
    %s129 = sphi 0, %s113
  $region4: #{_lambda_.1} parent=0 // loop_header_branch
    %13 = sbr.rel (%p11) target = $region8
  $region5: #{_lambda_.1} parent=0 // loop_body
    %s15 = ssub.s32 %s10, 1
    %s16 = ssub.s32 %s10, 2
    %s17 = sadd.s32 %s10, 1
    %s18 = ssub.s32 %s10, %s17
    %p19 = scmp.eq.s32.totalorder %s18, 0
    %s21 = sadd.s32 %s20, 1
    %s22 = scalar_select %p19, %s20, %s21
    %p25 = pneg %p19
    %p26 = scmp.eq.s32.totalorder %s10, 1
    %p27 = por %p25, %p26
    %p28 = scmp.ne.s32.totalorder %s20, %s23
    %p29 = scmp.eq.s32.totalorder %s10, 0
    %p30 = por %p28, %p29
    %p31 = scmp.ne.s32.totalorder %s20, %s23
    %p32 = scmp.eq.s32.totalorder %s15, 1
    %p33 = por %p31, %p32
    %p34 = scmp.ne.s32.totalorder %s23, %s24
    %p35 = scmp.eq.s32.totalorder %s15, 0
    %p36 = por %p34, %p35
    %p37 = scmp.ne.s32.totalorder %s23, %s24
    %p38 = scmp.eq.s32.totalorder %s16, 1
    %p39 = por %p37, %p38
    %p41 = scmp.ne.s32.totalorder %s24, %s40
    %p42 = scmp.eq.s32.totalorder %s16, 0
    %p43 = por %p41, %p42
    %s45 = sadd.s32 %s44, 1
    %p48 = scmp.eq.s32.totalorder %s10, 1
    %p49 = scmp.ne.s32.totalorder %s44, %s46
    %p50 = scmp.eq.s32.totalorder %s10, 0
    %p51 = por %p49, %p50
    %p52 = scmp.ne.s32.totalorder %s44, %s46
    %p53 = scmp.eq.s32.totalorder %s15, 1
    %p54 = por %p52, %p53
    %p55 = scmp.ne.s32.totalorder %s46, %s47
    %p56 = scmp.eq.s32.totalorder %s15, 0
    %p57 = por %p55, %p56
    %p58 = scmp.ne.s32.totalorder %s46, %s47
    %p59 = scmp.eq.s32.totalorder %s16, 1
    %p60 = por %p58, %p59
    %p62 = scmp.ne.s32.totalorder %s47, %s61
    %p63 = scmp.eq.s32.totalorder %s16, 0
    %p64 = por %p62, %p63
    %s66 = sadd.s32 %s65, 1
    %p69 = scmp.eq.s32.totalorder %s10, 1
    %p70 = scmp.ne.s32.totalorder %s65, %s67
    %p71 = scmp.eq.s32.totalorder %s10, 0
    %p72 = por %p70, %p71
    %p73 = scmp.ne.s32.totalorder %s65, %s67
    %p74 = scmp.eq.s32.totalorder %s15, 1
    %p75 = por %p73, %p74
    %p76 = scmp.ne.s32.totalorder %s67, %s68
    %p77 = scmp.eq.s32.totalorder %s15, 0
    %p78 = por %p76, %p77
    %p79 = scmp.ne.s32.totalorder %s67, %s68
    %p80 = scmp.eq.s32.totalorder %s16, 1
    %p81 = por %p79, %p80
    %p83 = scmp.ne.s32.totalorder %s68, %s82
    %p84 = scmp.eq.s32.totalorder %s16, 0
    %p85 = por %p83, %p84
    %s87 = sadd.s32 %s86, 1
    %p90 = scmp.eq.s32.totalorder %s10, 1
    %p91 = scmp.ne.s32.totalorder %s86, %s88
    %p92 = scmp.eq.s32.totalorder %s10, 0
    %p93 = por %p91, %p92
    %p94 = scmp.ne.s32.totalorder %s86, %s88
    %p95 = scmp.eq.s32.totalorder %s15, 1
    %p96 = por %p94, %p95
    %p97 = scmp.ne.s32.totalorder %s88, %s89
    %p98 = scmp.eq.s32.totalorder %s15, 0
    %p99 = por %p97, %p98
    %p100 = scmp.ne.s32.totalorder %s88, %s89
    %p101 = scmp.eq.s32.totalorder %s16, 1
    %p102 = por %p100, %p101
    %p104 = scmp.ne.s32.totalorder %s89, %s103
    %p105 = scmp.eq.s32.totalorder %s16, 0
    %p106 = por %p104, %p105
    %s107 = ssub.s32 %s10, %s17
    %p108 = scmp.eq.s32.totalorder %s107, 0
    %s110 = sadd.s32 %s109, 1
    %s111 = scalar_select %p108, %s109, %s110
    %p114 = pneg %p108
    %p115 = scmp.eq.s32.totalorder %s10, 1
    %p116 = por %p114, %p115
    %p117 = scmp.ne.s32.totalorder %s109, %s112
    %p118 = scmp.eq.s32.totalorder %s10, 0
    %p119 = por %p117, %p118
    %p120 = scmp.ne.s32.totalorder %s109, %s112
    %p121 = scmp.eq.s32.totalorder %s15, 1
    %p122 = por %p120, %p121
    %p123 = scmp.ne.s32.totalorder %s112, %s113
    %p124 = scmp.eq.s32.totalorder %s15, 0
    %p125 = por %p123, %p124
    %p126 = scmp.ne.s32.totalorder %s112, %s113
    %p127 = scmp.eq.s32.totalorder %s16, 1
    %p128 = por %p126, %p127
    %p130 = scmp.ne.s32.totalorder %s113, %s129
    %p131 = scmp.eq.s32.totalorder %s16, 0
    %p132 = por %p130, %p131
    %p133 = scmp.le.s32.totalorder 1, %s10
    %p134 = scmp.lt.s32.totalorder %s10, 3
    %p135 = pnand %p133, %p134
    %p136 = pneg %p135
    // Predicated region
    $region9: #{_lambda_.1} parent=5 // pred_check
      _
    $region10: #{_lambda_.1} parent=5 // pred_check_branch
      %138 = sbr.rel (%p135) target = $region12
    $region11: #{_lambda_.1} parent=5 // pred_region
      %s139 = ssub.s32 %s10, 1
      // Predicated region
      $region13: #{_lambda_.1} parent=11 // pred_check
        %p140 = pneg %p57
      $region14: #{_lambda_.1} parent=11 // pred_check_branch
        %142 = sbr.rel (%p140) target = $region16
      $region15: #{_lambda_.1} parent=11 // pred_region
        _
      $region16: #{_lambda_.1} parent=11 // pred_fallthru
        _
      // Predicated region
      $region17: #{_lambda_.1} parent=11 // pred_check
        %p143 = pneg %p78
      $region18: #{_lambda_.1} parent=11 // pred_check_branch
        %145 = sbr.rel (%p143) target = $region20
      $region19: #{_lambda_.1} parent=11 // pred_region
        _
      $region20: #{_lambda_.1} parent=11 // pred_fallthru
        _
      // Predicated region
      $region21: #{_lambda_.1} parent=11 // pred_check
        %p146 = pneg %p99
      $region22: #{_lambda_.1} parent=11 // pred_check_branch
        %148 = sbr.rel (%p146) target = $region24
      $region23: #{_lambda_.1} parent=11 // pred_region
        _
      $region24: #{_lambda_.1} parent=11 // pred_fallthru
        _
    $region12: #{_lambda_.1} parent=5 // pred_fallthru
      _
    %p149 = scmp.lt.s32.totalorder %s10, 2
    // Predicated region
    $region25: #{_lambda_.1} parent=5 // pred_check
      %p150 = pneg %p149
    $region26: #{_lambda_.1} parent=5 // pred_check_branch
      %152 = sbr.rel (%p150) target = $region28
    $region27: #{_lambda_.1} parent=5 // pred_region
      // Predicated region
      $region29: #{_lambda_.1} parent=27 // pred_check
        %p153 = pneg %p30
      $region30: #{_lambda_.1} parent=27 // pred_check_branch
        %155 = sbr.rel (%p153) target = $region32
      $region31: #{_lambda_.1} parent=27 // pred_region
        %p156 = scmp.lt.s32.totalorder %s10, 1
        %s157 = scalar_select %p156, %s10, 1
        %s158 = smul.addr %s157, 4
        %s159 = smul.addr %s158, 8
        %s160 = scalar_lea.vmem %s0, %s159
      $region32: #{_lambda_.1} parent=27 // pred_fallthru
        _
    $region28: #{_lambda_.1} parent=5 // pred_fallthru
      _
    %p161 = scmp.le.s32.totalorder 1, %s10
    %p162 = scmp.lt.s32.totalorder %s10, 3
    %p163 = pnand %p161, %p162
    %p164 = pneg %p163
    // Predicated region
    $region33: #{_lambda_.1} parent=5 // pred_check
      _
    $region34: #{_lambda_.1} parent=5 // pred_check_branch
      %166 = sbr.rel (%p163) target = $region36
    $region35: #{_lambda_.1} parent=5 // pred_region
      %s167 = ssub.s32 %s10, 1
      %p168 = scmp.lt.s32.totalorder %s15, 1
      %s169 = scalar_select %p168, %s15, 1
      %s170 = smul.addr %s169, 4
      %s171 = smul.addr %s170, 8
      %s172 = scalar_lea.vmem %s0, %s171
      %p173 = pneg %p36
      %p174 = pneg %p33
      %p175 = pneg %p57
      %p176 = pneg %p54
      %p177 = pneg %p78
      %p178 = pneg %p75
      %p179 = pneg %p99
      %p180 = pneg %p96
      %p181 = pneg %p125
      %p182 = pneg %p122
      %p183 = scmp.lt.s32.totalorder %s15, 1
      %s184 = scalar_select %p183, %s15, 1
      %s185 = smul.addr %s184, 4
      %s186 = smul.addr %s185, 8
      %s187 = scalar_lea.vmem %s4, %s186
      %p188 = scmp.lt.s32.totalorder %s15, 1
      %s189 = scalar_select %p188, %s15, 1
      %s190 = smul.addr %s189, 4
      %s191 = smul.addr %s190, 8
      %s192 = scalar_lea.vmem %s0, %s191
      %p193 = scmp.lt.s32.totalorder %s15, 1
      %s194 = scalar_select %p193, %s15, 1
      %s195 = smul.addr %s194, 4
      %s196 = smul.addr %s195, 8
      %s197 = scalar_lea.vmem %s4, %s196
      %v199 = vld [vmem:[%s192] sm:$0xff]
      %v200 = vld [vmem:[%s192 + $0x8] sm:$0xff]
      %v201 = vld [vmem:[%s192 + $0x10] sm:$0xff]
      %v202 = vld [vmem:[%s192 + $0x18] sm:$0xff]
      %v203 = vpack.c.bf16 %v201, %v199
      %v204 = vpack.c.bf16 %v202, %v200
      %206 = vrot.lane.b32.xlu0 %v204, 17
      %v207 = vpop.permute.xlu0 %206
      %209 = vrot.lane.b32.xlu0 %v203, 17
      %v210 = vpop.permute.xlu0 %209
      %vm211 = vcmask 138240
      %v212 = vsel %vm211, %v210, %v207
      %vm214 = vcmask 138240
      %v217 = vsel %vm214, %v207, %v210
      %v219 = vld [vmem:[%s3] sm:$0x3]
      %v222 = vunpack.c.l.s4 1966171168
      %v223 = vunpack.c.0.s8 %v222
      %v224 = vlaneseq
      %v225 = vshrl.u32 %v224, 7
      %v226 = vsub.s32 %v223, %v225
      %v227 = vrot.slane %v219, %v226
      %v228 = vcombine.high %v227, %v227
      %v230 = vunpack.c.l.s4 1966171168
      %v231 = vunpack.c.0.s8 %v230
      %v232 = vlaneseq
      %v233 = vshrl.u32 %v232, 7
      %v234 = vsub.s32 %v231, %v233
      %v235 = vrot.slane %v227, %v234
      %v237 = vunpack.c.l.s4 1966171168
      %v238 = vunpack.c.0.s8 %v237
      %v239 = vlaneseq
      %v240 = vshrl.u32 %v239, 7
      %v241 = vsub.s32 %v238, %v240
      %v242 = vrot.slane %v228, %v241
      %v244 = vpack.i.b16 %v235, %v235
      %v246 = vlaneseq
      %v247 = vshrl.u32 %v246, 7
      %v248 = vsub.s32 0, %v247
      %v249 = vrot.slane %v244, %v248
      %v251 = vpack.i.b16 %v242, %v242
      %v253 = vlaneseq
      %v254 = vshrl.u32 %v253, 7
      %v255 = vsub.s32 0, %v254
      %v256 = vrot.slane %v251, %v255
      %v257 = vmul.bf16 %v217, %v249
      %v258 = vmul.bf16 %v212, %v256
      %v261 = vunpack.c.l.b16 %v257
      %v262 = vunpack.c.l.b16 %v258
      %v263 = vunpack.c.h.b16 %v257
      %v264 = vunpack.c.h.b16 %v258
      %v265 = vpack.c.b16 %v262, %v261
      %v266 = vpack.c.b16 %v264, %v263
      %269 = vst [vmem:[#allocation2] sm:$0xff] %v265
      %270 = vst [vmem:[#allocation2 + $0x8] sm:$0xff] %v266
      %271 = vrot.lane.b32.xlu0 %v204, 16
      %v272 = vpop.permute.xlu0 %271
      %273 = vrot.lane.b32.xlu0 %v203, 16
      %v274 = vpop.permute.xlu0 %273
      %vm275 = vcmask 130048
      %v276 = vsel %vm275, %v274, %v272
      %vm278 = vcmask 130048
      %v281 = vsel %vm278, %v272, %v274
      %s283 = scalar_lea.vmem %s3, 2
      %v284 = vld [vmem:[%s283] sm:$0x3]
      %v287 = vunpack.c.l.s4 1966171168
      %v288 = vunpack.c.0.s8 %v287
      %v289 = vlaneseq
      %v290 = vshrl.u32 %v289, 7
      %v291 = vsub.s32 %v288, %v290
      %v292 = vrot.slane %v284, %v291
      %v293 = vcombine.high %v292, %v292
      %v295 = vunpack.c.l.s4 1966171168
      %v296 = vunpack.c.0.s8 %v295
      %v297 = vlaneseq
      %v298 = vshrl.u32 %v297, 7
      %v299 = vsub.s32 %v296, %v298
      %v300 = vrot.slane %v292, %v299
      %v302 = vunpack.c.l.s4 1966171168
      %v303 = vunpack.c.0.s8 %v302
      %v304 = vlaneseq
      %v305 = vshrl.u32 %v304, 7
      %v306 = vsub.s32 %v303, %v305
      %v307 = vrot.slane %v293, %v306
      %v309 = vpack.i.b16 %v300, %v300
      %v311 = vlaneseq
      %v312 = vshrl.u32 %v311, 7
      %v313 = vsub.s32 0, %v312
      %v314 = vrot.slane %v309, %v313
      %v316 = vpack.i.b16 %v307, %v307
      %v318 = vlaneseq
      %v319 = vshrl.u32 %v318, 7
      %v320 = vsub.s32 0, %v319
      %v321 = vrot.slane %v316, %v320
      %v322 = vmul.bf16 %v281, %v314
      %v323 = vmul.bf16 %v276, %v321
      %v326 = vunpack.c.l.b16 %v322
      %v327 = vunpack.c.l.b16 %v323
      %v328 = vunpack.c.h.b16 %v322
      %v329 = vunpack.c.h.b16 %v323
      %v330 = vpack.c.b16 %v327, %v326
      %v331 = vpack.c.b16 %v329, %v328
      %334 = vst [vmem:[#allocation2 + $0x10] sm:$0xff] %v330
      %335 = vst [vmem:[#allocation2 + $0x18] sm:$0xff] %v331
      %336 = vrot.lane.b32.xlu0 %v204, 15
      %v337 = vpop.permute.xlu0 %336
      %338 = vrot.lane.b32.xlu0 %v203, 15
      %v339 = vpop.permute.xlu0 %338
      %vm340 = vcmask 121856
      %v341 = vsel %vm340, %v339, %v337
      %vm343 = vcmask 121856
      %v346 = vsel %vm343, %v337, %v339
      %s348 = scalar_lea.vmem %s3, 4
      %v349 = vld [vmem:[%s348] sm:$0x3]
      %v352 = vunpack.c.l.s4 1966171168
      %v353 = vunpack.c.0.s8 %v352
      %v354 = vlaneseq
      %v355 = vshrl.u32 %v354, 7
      %v356 = vsub.s32 %v353, %v355
      %v357 = vrot.slane %v349, %v356
      %v358 = vcombine.high %v357, %v357
      %v360 = vunpack.c.l.s4 1966171168
      %v361 = vunpack.c.0.s8 %v360
      %v362 = vlaneseq
      %v363 = vshrl.u32 %v362, 7
      %v364 = vsub.s32 %v361, %v363
      %v365 = vrot.slane %v357, %v364
      %v367 = vunpack.c.l.s4 1966171168
      %v368 = vunpack.c.0.s8 %v367
      %v369 = vlaneseq
      %v370 = vshrl.u32 %v369, 7
      %v371 = vsub.s32 %v368, %v370
      %v372 = vrot.slane %v358, %v371
      %v374 = vpack.i.b16 %v365, %v365
      %v376 = vlaneseq
      %v377 = vshrl.u32 %v376, 7
      %v378 = vsub.s32 0, %v377
      %v379 = vrot.slane %v374, %v378
      %v381 = vpack.i.b16 %v372, %v372
      %v383 = vlaneseq
      %v384 = vshrl.u32 %v383, 7
      %v385 = vsub.s32 0, %v384
      %v386 = vrot.slane %v381, %v385
      %v387 = vmul.bf16 %v346, %v379
      %v388 = vmul.bf16 %v341, %v386
      %v391 = vunpack.c.l.b16 %v387
      %v392 = vunpack.c.l.b16 %v388
      %v393 = vunpack.c.h.b16 %v387
      %v394 = vunpack.c.h.b16 %v388
      %v395 = vpack.c.b16 %v392, %v391
      %v396 = vpack.c.b16 %v394, %v393
      %399 = vst [vmem:[#allocation2 + $0x20] sm:$0xff] %v395
      %400 = vst [vmem:[#allocation2 + $0x28] sm:$0xff] %v396
      %401 = vrot.lane.b32.xlu0 %v204, 1
      %v402 = vpop.permute.xlu0 %401
      %403 = vrot.lane.b32.xlu0 %v203, 1
      %v404 = vpop.permute.xlu0 %403
      %vm405 = vcmask 7168
      %v406 = vsel %vm405, %v404, %v402
      %vm408 = vcmask 7168
      %v411 = vsel %vm408, %v402, %v404
      %s413 = scalar_lea.vmem %s3, 6
      %v414 = vld [vmem:[%s413] sm:$0x3]
      %v417 = vunpack.c.l.s4 1966171168
      %v418 = vunpack.c.0.s8 %v417
      %v419 = vlaneseq
      %v420 = vshrl.u32 %v419, 7
      %v421 = vsub.s32 %v418, %v420
      %v422 = vrot.slane %v414, %v421
      %v423 = vcombine.high %v422, %v422
      %v425 = vunpack.c.l.s4 1966171168
      %v426 = vunpack.c.0.s8 %v425
      %v427 = vlaneseq
      %v428 = vshrl.u32 %v427, 7
      %v429 = vsub.s32 %v426, %v428
      %v430 = vrot.slane %v422, %v429
      %v432 = vunpack.c.l.s4 1966171168
      %v433 = vunpack.c.0.s8 %v432
      %v434 = vlaneseq
      %v435 = vshrl.u32 %v434, 7
      %v436 = vsub.s32 %v433, %v435
      %v437 = vrot.slane %v423, %v436
      %v439 = vpack.i.b16 %v430, %v430
      %v441 = vlaneseq
      %v442 = vshrl.u32 %v441, 7
      %v443 = vsub.s32 0, %v442
      %v444 = vrot.slane %v439, %v443
      %v446 = vpack.i.b16 %v437, %v437
      %v448 = vlaneseq
      %v449 = vshrl.u32 %v448, 7
      %v450 = vsub.s32 0, %v449
      %v451 = vrot.slane %v446, %v450
      %v452 = vmul.bf16 %v411, %v444
      %v453 = vmul.bf16 %v406, %v451
      %v456 = vunpack.c.l.b16 %v452
      %v457 = vunpack.c.l.b16 %v453
      %v458 = vunpack.c.h.b16 %v452
      %v459 = vunpack.c.h.b16 %v453
      %v460 = vpack.c.b16 %v457, %v456
      %v461 = vpack.c.b16 %v459, %v458
      %464 = vst [vmem:[#allocation2 + $0x30] sm:$0xff] %v460
      %465 = vst [vmem:[#allocation2 + $0x38] sm:$0xff] %v461
      %s466 = scalar_lea.vmem %s3, 8
      %v467 = vld [vmem:[%s466] sm:$0x3]
      %v470 = vunpack.c.l.s4 1966171168
      %v471 = vunpack.c.0.s8 %v470
      %v472 = vlaneseq
      %v473 = vshrl.u32 %v472, 7
      %v474 = vsub.s32 %v471, %v473
      %v475 = vrot.slane %v467, %v474
      %v476 = vcombine.high %v475, %v475
      %v478 = vunpack.c.l.s4 1966171168
      %v479 = vunpack.c.0.s8 %v478
      %v480 = vlaneseq
      %v481 = vshrl.u32 %v480, 7
      %v482 = vsub.s32 %v479, %v481
      %v483 = vrot.slane %v475, %v482
      %v485 = vunpack.c.l.s4 1966171168
      %v486 = vunpack.c.0.s8 %v485
      %v487 = vlaneseq
      %v488 = vshrl.u32 %v487, 7
      %v489 = vsub.s32 %v486, %v488
      %v490 = vrot.slane %v476, %v489
      %v492 = vpack.i.b16 %v483, %v483
      %v494 = vlaneseq
      %v495 = vshrl.u32 %v494, 7
      %v496 = vsub.s32 0, %v495
      %v497 = vrot.slane %v492, %v496
      %v499 = vpack.i.b16 %v490, %v490
      %v501 = vlaneseq
      %v502 = vshrl.u32 %v501, 7
      %v503 = vsub.s32 0, %v502
      %v504 = vrot.slane %v499, %v503
      %v505 = vmul.bf16 %v203, %v497
      %v506 = vmul.bf16 %v204, %v504
      %v509 = vunpack.c.l.b16 %v505
      %v510 = vunpack.c.l.b16 %v506
      %v511 = vunpack.c.h.b16 %v505
      %v512 = vunpack.c.h.b16 %v506
      %v513 = vpack.c.b16 %v510, %v509
      %v514 = vpack.c.b16 %v512, %v511
      %517 = vst [vmem:[#allocation2 + $0x40] sm:$0xff] %v513
      %518 = vst [vmem:[#allocation2 + $0x48] sm:$0xff] %v514
      %519 = vrot.lane.b32.xlu0 %v203, 127
      %v520 = vpop.permute.xlu0 %519
      %521 = vrot.lane.b32.xlu0 %v204, 127
      %v522 = vpop.permute.xlu0 %521
      %vm523 = vcmask 1039360
      %v524 = vsel %vm523, %v520, %v522
      %vm526 = vcmask 1039360
      %v529 = vsel %vm526, %v522, %v520
      %s531 = scalar_lea.vmem %s3, 10
      %v532 = vld [vmem:[%s531] sm:$0x3]
      %v535 = vunpack.c.l.s4 1966171168
      %v536 = vunpack.c.0.s8 %v535
      %v537 = vlaneseq
      %v538 = vshrl.u32 %v537, 7
      %v539 = vsub.s32 %v536, %v538
      %v540 = vrot.slane %v532, %v539
      %v541 = vcombine.high %v540, %v540
      %v543 = vunpack.c.l.s4 1966171168
      %v544 = vunpack.c.0.s8 %v543
      %v545 = vlaneseq
      %v546 = vshrl.u32 %v545, 7
      %v547 = vsub.s32 %v544, %v546
      %v548 = vrot.slane %v540, %v547
      %v550 = vunpack.c.l.s4 1966171168
      %v551 = vunpack.c.0.s8 %v550
      %v552 = vlaneseq
      %v553 = vshrl.u32 %v552, 7
      %v554 = vsub.s32 %v551, %v553
      %v555 = vrot.slane %v541, %v554
      %v557 = vpack.i.b16 %v548, %v548
      %v559 = vlaneseq
      %v560 = vshrl.u32 %v559, 7
      %v561 = vsub.s32 0, %v560
      %v562 = vrot.slane %v557, %v561
      %v564 = vpack.i.b16 %v555, %v555
      %v566 = vlaneseq
      %v567 = vshrl.u32 %v566, 7
      %v568 = vsub.s32 0, %v567
      %v569 = vrot.slane %v564, %v568
      %v570 = vmul.bf16 %v524, %v562
      %v571 = vmul.bf16 %v529, %v569
      %v574 = vunpack.c.l.b16 %v570
      %v575 = vunpack.c.l.b16 %v571
      %v576 = vunpack.c.h.b16 %v570
      %v577 = vunpack.c.h.b16 %v571
      %v578 = vpack.c.b16 %v575, %v574
      %v579 = vpack.c.b16 %v577, %v576
      %582 = vst [vmem:[#allocation2 + $0x50] sm:$0xff] %v578
      %583 = vst [vmem:[#allocation2 + $0x58] sm:$0xff] %v579
      %584 = vrot.lane.b32.xlu0 %v203, 113
      %v585 = vpop.permute.xlu0 %584
      %586 = vrot.lane.b32.xlu0 %v204, 113
      %v587 = vpop.permute.xlu0 %586
      %vm588 = vcmask 924672
      %v589 = vsel %vm588, %v585, %v587
      %vm591 = vcmask 924672
      %v594 = vsel %vm591, %v587, %v585
      %s596 = scalar_lea.vmem %s3, 12
      %v597 = vld [vmem:[%s596] sm:$0x3]
      %v600 = vunpack.c.l.s4 1966171168
      %v601 = vunpack.c.0.s8 %v600
      %v602 = vlaneseq
      %v603 = vshrl.u32 %v602, 7
      %v604 = vsub.s32 %v601, %v603
      %v605 = vrot.slane %v597, %v604
      %v606 = vcombine.high %v605, %v605
      %v608 = vunpack.c.l.s4 1966171168
      %v609 = vunpack.c.0.s8 %v608
      %v610 = vlaneseq
      %v611 = vshrl.u32 %v610, 7
      %v612 = vsub.s32 %v609, %v611
      %v613 = vrot.slane %v605, %v612
      %v615 = vunpack.c.l.s4 1966171168
      %v616 = vunpack.c.0.s8 %v615
      %v617 = vlaneseq
      %v618 = vshrl.u32 %v617, 7
      %v619 = vsub.s32 %v616, %v618
      %v620 = vrot.slane %v606, %v619
      %v622 = vpack.i.b16 %v613, %v613
      %v624 = vlaneseq
      %v625 = vshrl.u32 %v624, 7
      %v626 = vsub.s32 0, %v625
      %v627 = vrot.slane %v622, %v626
      %v629 = vpack.i.b16 %v620, %v620
      %v631 = vlaneseq
      %v632 = vshrl.u32 %v631, 7
      %v633 = vsub.s32 0, %v632
      %v634 = vrot.slane %v629, %v633
      %v635 = vmul.bf16 %v589, %v627
      %v636 = vmul.bf16 %v594, %v634
      %v639 = vunpack.c.l.b16 %v635
      %v640 = vunpack.c.l.b16 %v636
      %v641 = vunpack.c.h.b16 %v635
      %v642 = vunpack.c.h.b16 %v636
      %v643 = vpack.c.b16 %v640, %v639
      %v644 = vpack.c.b16 %v642, %v641
      %647 = vst [vmem:[#allocation2 + $0x60] sm:$0xff] %v643
      %648 = vst [vmem:[#allocation2 + $0x68] sm:$0xff] %v644
      %649 = vrot.lane.b32.xlu0 %v203, 112
      %v650 = vpop.permute.xlu0 %649
      %651 = vrot.lane.b32.xlu0 %v204, 112
      %v652 = vpop.permute.xlu0 %651
      %vm653 = vcmask 916480
      %v654 = vsel %vm653, %v650, %v652
      %vm656 = vcmask 916480
      %v659 = vsel %vm656, %v652, %v650
      %s661 = scalar_lea.vmem %s3, 14
      %v662 = vld [vmem:[%s661] sm:$0x3]
      %v665 = vunpack.c.l.s4 1966171168
      %v666 = vunpack.c.0.s8 %v665
      %v667 = vlaneseq
      %v668 = vshrl.u32 %v667, 7
      %v669 = vsub.s32 %v666, %v668
      %v670 = vrot.slane %v662, %v669
      %v671 = vcombine.high %v670, %v670
      %v673 = vunpack.c.l.s4 1966171168
      %v674 = vunpack.c.0.s8 %v673
      %v675 = vlaneseq
      %v676 = vshrl.u32 %v675, 7
      %v677 = vsub.s32 %v674, %v676
      %v678 = vrot.slane %v670, %v677
      %v680 = vunpack.c.l.s4 1966171168
      %v681 = vunpack.c.0.s8 %v680
      %v682 = vlaneseq
      %v683 = vshrl.u32 %v682, 7
      %v684 = vsub.s32 %v681, %v683
      %v685 = vrot.slane %v671, %v684
      %v687 = vpack.i.b16 %v678, %v678
      %v689 = vlaneseq
      %v690 = vshrl.u32 %v689, 7
      %v691 = vsub.s32 0, %v690
      %v692 = vrot.slane %v687, %v691
      %v694 = vpack.i.b16 %v685, %v685
      %v696 = vlaneseq
      %v697 = vshrl.u32 %v696, 7
      %v698 = vsub.s32 0, %v697
      %v699 = vrot.slane %v694, %v698
      %v700 = vmul.bf16 %v654, %v692
      %v701 = vmul.bf16 %v659, %v699
      %v704 = vunpack.c.l.b16 %v700
      %v705 = vunpack.c.l.b16 %v701
      %v706 = vunpack.c.h.b16 %v700
      %v707 = vunpack.c.h.b16 %v701
      %v708 = vpack.c.b16 %v705, %v704
      %v709 = vpack.c.b16 %v707, %v706
      %712 = vst [vmem:[#allocation2 + $0x70] sm:$0xff] %v708
      %713 = vst [vmem:[#allocation2 + $0x78] sm:$0xff] %v709
      %714 = vrot.lane.b32.xlu0 %v203, 111
      %v715 = vpop.permute.xlu0 %714
      %716 = vrot.lane.b32.xlu0 %v204, 111
      %v717 = vpop.permute.xlu0 %716
      %vm718 = vcmask 908288
      %v719 = vsel %vm718, %v715, %v717
      %vm721 = vcmask 908288
      %v724 = vsel %vm721, %v717, %v715
      %s726 = scalar_lea.vmem %s3, 16
      %v727 = vld [vmem:[%s726] sm:$0x3]
      %v730 = vunpack.c.l.s4 1966171168
      %v731 = vunpack.c.0.s8 %v730
      %v732 = vlaneseq
      %v733 = vshrl.u32 %v732, 7
      %v734 = vsub.s32 %v731, %v733
      %v735 = vrot.slane %v727, %v734
      %v736 = vcombine.high %v735, %v735
      %v738 = vunpack.c.l.s4 1966171168
      %v739 = vunpack.c.0.s8 %v738
      %v740 = vlaneseq
      %v741 = vshrl.u32 %v740, 7
      %v742 = vsub.s32 %v739, %v741
      %v743 = vrot.slane %v735, %v742
      %v745 = vunpack.c.l.s4 1966171168
      %v746 = vunpack.c.0.s8 %v745
      %v747 = vlaneseq
      %v748 = vshrl.u32 %v747, 7
      %v749 = vsub.s32 %v746, %v748
      %v750 = vrot.slane %v736, %v749
      %v752 = vpack.i.b16 %v743, %v743
      %v754 = vlaneseq
      %v755 = vshrl.u32 %v754, 7
      %v756 = vsub.s32 0, %v755
      %v757 = vrot.slane %v752, %v756
      %v759 = vpack.i.b16 %v750, %v750
      %v761 = vlaneseq
      %v762 = vshrl.u32 %v761, 7
      %v763 = vsub.s32 0, %v762
      %v764 = vrot.slane %v759, %v763
      %v765 = vmul.bf16 %v719, %v757
      %v766 = vmul.bf16 %v724, %v764
      %v769 = vunpack.c.l.b16 %v765
      %v770 = vunpack.c.l.b16 %v766
      %v771 = vunpack.c.h.b16 %v765
      %v772 = vunpack.c.h.b16 %v766
      %v773 = vpack.c.b16 %v770, %v769
      %v774 = vpack.c.b16 %v772, %v771
      %777 = vst [vmem:[#allocation2 + $0x80] sm:$0xff] %v773
      %778 = vst [vmem:[#allocation2 + $0x88] sm:$0xff] %v774
      %v779 = vld [vmem:[%s1] sm:$0xff]
      %v780 = vld [vmem:[%s1 + $0x8] sm:$0xff]
      %v781 = vld [vmem:[#allocation2] sm:$0xff]
      %v782 = vld [vmem:[#allocation2 + $0x8] sm:$0xff]
      %v783 = vld [vmem:[#allocation2 + $0x10] sm:$0xff]
      %v784 = vld [vmem:[#allocation2 + $0x18] sm:$0xff]
      %v785 = vld [vmem:[#allocation2 + $0x20] sm:$0xff]
      %v786 = vld [vmem:[#allocation2 + $0x28] sm:$0xff]
      %v787 = vld [vmem:[#allocation2 + $0x30] sm:$0xff]
      %v788 = vld [vmem:[#allocation2 + $0x38] sm:$0xff]
      %v789 = vld [vmem:[#allocation2 + $0x40] sm:$0xff]
      %v790 = vld [vmem:[#allocation2 + $0x48] sm:$0xff]
      %v791 = vld [vmem:[#allocation2 + $0x50] sm:$0xff]
      %v792 = vld [vmem:[#allocation2 + $0x58] sm:$0xff]
      %v793 = vld [vmem:[#allocation2 + $0x60] sm:$0xff]
      %v794 = vld [vmem:[#allocation2 + $0x68] sm:$0xff]
      %v795 = vld [vmem:[#allocation2 + $0x70] sm:$0xff]
      %v796 = vld [vmem:[#allocation2 + $0x78] sm:$0xff]
      %v797 = vld [vmem:[#allocation2 + $0x80] sm:$0xff]
      %v798 = vld [vmem:[#allocation2 + $0x88] sm:$0xff]
      %v801 = vunpack.c.l.b16 %v779
      %v802 = vunpack.c.h.b16 %v779
      %v803 = vunpack.c.l.b16 %v780
      %v804 = vunpack.c.h.b16 %v780
      %v805 = vpack.c.b16 %v803, %v801
      %v806 = vpack.c.b16 %v804, %v802
      %v826 = vunpack.c.l.b16 %v781
      %v827 = vunpack.c.h.b16 %v781
      %v828 = vunpack.c.l.b16 %v782
      %v829 = vunpack.c.h.b16 %v782
      %v830 = vunpack.c.l.b16 %v783
      %v831 = vunpack.c.h.b16 %v783
      %v832 = vunpack.c.l.b16 %v784
      %v833 = vunpack.c.h.b16 %v784
      %v834 = vunpack.c.l.b16 %v785
      %v835 = vunpack.c.h.b16 %v785
      %v836 = vunpack.c.l.b16 %v786
      %v837 = vunpack.c.h.b16 %v786
      %v838 = vunpack.c.l.b16 %v787
      %v839 = vunpack.c.h.b16 %v787
      %v840 = vunpack.c.l.b16 %v788
      %v841 = vunpack.c.h.b16 %v788
      %v842 = vunpack.c.l.b16 %v789
      %v843 = vunpack.c.h.b16 %v789
      %v844 = vunpack.c.l.b16 %v790
      %v845 = vunpack.c.h.b16 %v790
      %v846 = vunpack.c.l.b16 %v791
      %v847 = vunpack.c.h.b16 %v791
      %v848 = vunpack.c.l.b16 %v792
      %v849 = vunpack.c.h.b16 %v792
      %v850 = vunpack.c.l.b16 %v793
      %v851 = vunpack.c.h.b16 %v793
      %v852 = vunpack.c.l.b16 %v794
      %v853 = vunpack.c.h.b16 %v794
      %v854 = vunpack.c.l.b16 %v795
      %v855 = vunpack.c.h.b16 %v795
      %v856 = vunpack.c.l.b16 %v796
      %v857 = vunpack.c.h.b16 %v796
      %v858 = vunpack.c.l.b16 %v797
      %v859 = vunpack.c.h.b16 %v797
      %v860 = vunpack.c.l.b16 %v798
      %v861 = vunpack.c.h.b16 %v798
      %v862 = vpack.c.b16 %v828, %v826
      %v863 = vpack.c.b16 %v829, %v827
      %v864 = vpack.c.b16 %v832, %v830
      %v865 = vpack.c.b16 %v833, %v831
      %v866 = vpack.c.b16 %v836, %v834
      %v867 = vpack.c.b16 %v837, %v835
      %v868 = vpack.c.b16 %v840, %v838
      %v869 = vpack.c.b16 %v841, %v839
      %v870 = vpack.c.b16 %v844, %v842
      %v871 = vpack.c.b16 %v845, %v843
      %v872 = vpack.c.b16 %v848, %v846
      %v873 = vpack.c.b16 %v849, %v847
      %v874 = vpack.c.b16 %v852, %v850
      %v875 = vpack.c.b16 %v853, %v851
      %v876 = vpack.c.b16 %v856, %v854
      %v877 = vpack.c.b16 %v857, %v855
      %v878 = vpack.c.b16 %v860, %v858
      %v879 = vpack.c.b16 %v861, %v859
      %v899 = vsel %vm278, %v806, 0
      %901 = vmatprep.subr.bf16.mxu0 %v877
      %902 = vmatpush1.bf16.msra.mxu0 %v876
      %903 = vmatprep.subr.bf16.mxu0 %v875
      %904 = vmatpush1.bf16.msra.mxu0 %v874
      %905 = vmatprep.subr.bf16.mxu0 %v873
      %906 = vmatpush1.bf16.msra.mxu0 %v872
      %907 = vmatprep.subr.bf16.mxu0 %v871
      %908 = vmatpush1.bf16.msra.mxu0 %v870
      %909 = vmatprep.subr.bf16.mxu0 %v869
      %910 = vmatpush1.bf16.msra.mxu0 %v868
      %911 = vmatprep.subr.bf16.mxu0 %v867
      %912 = vmatpush1.bf16.msra.mxu0 %v866
      %913 = vmatprep.subr.bf16.mxu0 %v865
      %914 = vmatpush1.bf16.msra.mxu0 %v864
      %915 = vmatprep.subr.bf16.mxu0 %v863
      %916 = vmatpush1.bf16.msra.mxu0 %v862
      %917 = vmatprep.subr.bf16.mxu0 0
      %918 = vmatpush2.bf16.msra.mxu0 0
      %919 = vmatprep.subr.bf16.mxu0 0
      %920 = vmatpush2.bf16.msra.mxu0 0
      %921 = vmatprep.subr.bf16.mxu0 0
      %922 = vmatpush2.bf16.msra.mxu0 0
      %923 = vmatprep.subr.bf16.mxu0 0
      %924 = vmatpush2.bf16.msra.mxu0 0
      %925 = vmatprep.subr.bf16.mxu0 0
      %926 = vmatpush2.bf16.msra.mxu0 0
      %927 = vmatprep.subr.bf16.mxu0 0
      %928 = vmatpush2.bf16.msra.mxu0 0
      %929 = vmatprep.subr.bf16.mxu0 0
      %930 = vmatpush2.bf16.msra.mxu0 0
      %931 = vmatprep.subr.bf16.mxu0 %v879
      %932 = vmatpush2.bf16.msra.mxu0 %v878
      %933 = vmatprep.mubr.bf16.mxu0 %v899
      %934 = vmatmul.mubr.bf16.gmra.mxu0 %v805
      %v935 = vpop.f32.mrf.mxu0
      %v936 = vadd.f32 0.0, %v935
      %v937 = vpop.f32.mrf.mxu0
      %v938 = vadd.f32 0.0, %v937
      %v939 = vpop.f32.mrf.mxu0
      %v940 = vadd.f32 0.0, %v939
      %v941 = vpop.f32.mrf.mxu0
      %v942 = vadd.f32 0.0, %v941
      %943 = vdwg.mxu0
      %v944 = vadd.f32 %v936, %v938
      %945 = vadd.xlane.f32.xlu0 %v944
      %v946 = vpop.xlane.xlu0 %945
      %v947 = vadd.f32 %v940, %v942
      %948 = vadd.xlane.f32.xlu0 %v947
      %v949 = vpop.xlane.xlu0 %948
      %v950 = vmul.f32 %v936, %v936
      %v951 = vmul.f32 %v938, %v938
      %v952 = vmul.f32 %v940, %v940
      %v953 = vmul.f32 %v942, %v942
      %v954 = vadd.f32 %v950, %v951
      %955 = vadd.xlane.f32.xlu0 %v954
      %v956 = vpop.xlane.xlu0 %955
      %v957 = vadd.f32 %v952, %v953
      %958 = vadd.xlane.f32.xlu0 %v957
      %v959 = vpop.xlane.xlu0 %958
      %v960 = vmul.f32 %v946, 0.00390625
      %v961 = vmul.f32 %v949, 0.00390625
      %v962 = vmul.f32 %v956, 0.00390625
      %v963 = vmul.f32 %v959, 0.00390625
      %v964 = vmul.f32 %v960, %v960
      %v965 = vmul.f32 %v961, %v961
      %v966 = vsub.f32 %v962, %v964
      %v967 = vsub.f32 %v963, %v965
      %v968 = vsub.f32 %v936, %v960
      %v969 = vsub.f32 %v938, %v960
      %v970 = vsub.f32 %v940, %v961
      %v971 = vsub.f32 %v942, %v961
      %v972 = vadd.f32 %v966, 1e-05
      %v973 = vadd.f32 %v967, 1e-05
      %v974 = vrsqrt.pop %v972
      %v975 = vrsqrt.pop %v973
      %v976 = vmul.f32 %v968, %v974
      %v977 = vmul.f32 %v969, %v974
      %v978 = vmul.f32 %v970, %v975
      %v979 = vmul.f32 %v971, %v975
      %vm980 = vcmp.ge.f32.partialorder %v976, 0.0
      %vm981 = vcmp.ge.f32.partialorder %v977, 0.0
      %vm982 = vcmp.ge.f32.partialorder %v978, 0.0
      %vm983 = vcmp.ge.f32.partialorder %v979, 0.0
      %v984 = vmul.f32 %v976, 0.01
      %v985 = vmul.f32 %v977, 0.01
      %v986 = vmul.f32 %v978, 0.01
      %v987 = vmul.f32 %v979, 0.01
      %v988 = vsel %vm980, %v976, %v984
      %v989 = vsel %vm981, %v977, %v985
      %v990 = vsel %vm982, %v978, %v986
      %v991 = vsel %vm983, %v979, %v987
      %v992 = vpack.c.bf16 %v990, %v988
      %v993 = vpack.c.bf16 %v991, %v989
      %995 = vrot.lane.b32.xlu0 %v993, 17
      %v996 = vpop.permute.xlu0 %995
      %998 = vrot.lane.b32.xlu0 %v992, 17
      %v999 = vpop.permute.xlu0 %998
      %v1000 = vsel %vm211, %v999, %v996
      %v1004 = vsel %vm214, %v996, %v999
      %v1006 = vld [vmem:[%s3] sm:$0x3]
      %v1009 = vunpack.c.l.s4 1966171168
      %v1010 = vunpack.c.0.s8 %v1009
      %v1011 = vlaneseq
      %v1012 = vshrl.u32 %v1011, 7
      %v1013 = vsub.s32 %v1010, %v1012
      %v1014 = vrot.slane %v1006, %v1013
      %v1015 = vcombine.high %v1014, %v1014
      %v1017 = vunpack.c.l.s4 1966171168
      %v1018 = vunpack.c.0.s8 %v1017
      %v1019 = vlaneseq
      %v1020 = vshrl.u32 %v1019, 7
      %v1021 = vsub.s32 %v1018, %v1020
      %v1022 = vrot.slane %v1014, %v1021
      %v1024 = vunpack.c.l.s4 1966171168
      %v1025 = vunpack.c.0.s8 %v1024
      %v1026 = vlaneseq
      %v1027 = vshrl.u32 %v1026, 7
      %v1028 = vsub.s32 %v1025, %v1027
      %v1029 = vrot.slane %v1015, %v1028
      %v1031 = vpack.i.b16 %v1022, %v1022
      %v1033 = vlaneseq
      %v1034 = vshrl.u32 %v1033, 7
      %v1035 = vsub.s32 0, %v1034
      %v1036 = vrot.slane %v1031, %v1035
      %v1038 = vpack.i.b16 %v1029, %v1029
      %v1040 = vlaneseq
      %v1041 = vshrl.u32 %v1040, 7
      %v1042 = vsub.s32 0, %v1041
      %v1043 = vrot.slane %v1038, %v1042
      %v1044 = vmul.bf16 %v1004, %v1036
      %v1045 = vmul.bf16 %v1000, %v1043
      %v1048 = vunpack.c.l.b16 %v1044
      %v1049 = vunpack.c.l.b16 %v1045
      %v1050 = vunpack.c.h.b16 %v1044
      %v1051 = vunpack.c.h.b16 %v1045
      %v1052 = vpack.c.b16 %v1049, %v1048
      %v1053 = vpack.c.b16 %v1051, %v1050
      %1056 = vst [vmem:[#allocation3] sm:$0xff] %v1052
      %1057 = vst [vmem:[#allocation3 + $0x8] sm:$0xff] %v1053
      %1058 = vrot.lane.b32.xlu0 %v993, 16
      %v1059 = vpop.permute.xlu0 %1058
      %1060 = vrot.lane.b32.xlu0 %v992, 16
      %v1061 = vpop.permute.xlu0 %1060
      %v1062 = vsel %vm275, %v1061, %v1059
      %v1066 = vsel %vm278, %v1059, %v1061
      %v1068 = vld [vmem:[%s283] sm:$0x3]
      %v1071 = vunpack.c.l.s4 1966171168
      %v1072 = vunpack.c.0.s8 %v1071
      %v1073 = vlaneseq
      %v1074 = vshrl.u32 %v1073, 7
      %v1075 = vsub.s32 %v1072, %v1074
      %v1076 = vrot.slane %v1068, %v1075
      %v1077 = vcombine.high %v1076, %v1076
      %v1079 = vunpack.c.l.s4 1966171168
      %v1080 = vunpack.c.0.s8 %v1079
      %v1081 = vlaneseq
      %v1082 = vshrl.u32 %v1081, 7
      %v1083 = vsub.s32 %v1080, %v1082
      %v1084 = vrot.slane %v1076, %v1083
      %v1086 = vunpack.c.l.s4 1966171168
      %v1087 = vunpack.c.0.s8 %v1086
      %v1088 = vlaneseq
      %v1089 = vshrl.u32 %v1088, 7
      %v1090 = vsub.s32 %v1087, %v1089
      %v1091 = vrot.slane %v1077, %v1090
      %v1093 = vpack.i.b16 %v1084, %v1084
      %v1095 = vlaneseq
      %v1096 = vshrl.u32 %v1095, 7
      %v1097 = vsub.s32 0, %v1096
      %v1098 = vrot.slane %v1093, %v1097
      %v1100 = vpack.i.b16 %v1091, %v1091
      %v1102 = vlaneseq
      %v1103 = vshrl.u32 %v1102, 7
      %v1104 = vsub.s32 0, %v1103
      %v1105 = vrot.slane %v1100, %v1104
      %v1106 = vmul.bf16 %v1066, %v1098
      %v1107 = vmul.bf16 %v1062, %v1105
      %v1110 = vunpack.c.l.b16 %v1106
      %v1111 = vunpack.c.l.b16 %v1107
      %v1112 = vunpack.c.h.b16 %v1106
      %v1113 = vunpack.c.h.b16 %v1107
      %v1114 = vpack.c.b16 %v1111, %v1110
      %v1115 = vpack.c.b16 %v1113, %v1112
      %1118 = vst [vmem:[#allocation3 + $0x10] sm:$0xff] %v1114
      %1119 = vst [vmem:[#allocation3 + $0x18] sm:$0xff] %v1115
      %1120 = vrot.lane.b32.xlu0 %v993, 15
      %v1121 = vpop.permute.xlu0 %1120
      %1122 = vrot.lane.b32.xlu0 %v992, 15
      %v1123 = vpop.permute.xlu0 %1122
      %v1124 = vsel %vm340, %v1123, %v1121
      %v1128 = vsel %vm343, %v1121, %v1123
      %v1130 = vld [vmem:[%s348] sm:$0x3]
      %v1133 = vunpack.c.l.s4 1966171168
      %v1134 = vunpack.c.0.s8 %v1133
      %v1135 = vlaneseq
      %v1136 = vshrl.u32 %v1135, 7
      %v1137 = vsub.s32 %v1134, %v1136
      %v1138 = vrot.slane %v1130, %v1137
      %v1139 = vcombine.high %v1138, %v1138
      %v1141 = vunpack.c.l.s4 1966171168
      %v1142 = vunpack.c.0.s8 %v1141
      %v1143 = vlaneseq
      %v1144 = vshrl.u32 %v1143, 7
      %v1145 = vsub.s32 %v1142, %v1144
      %v1146 = vrot.slane %v1138, %v1145
      %v1148 = vunpack.c.l.s4 1966171168
      %v1149 = vunpack.c.0.s8 %v1148
      %v1150 = vlaneseq
      %v1151 = vshrl.u32 %v1150, 7
      %v1152 = vsub.s32 %v1149, %v1151
      %v1153 = vrot.slane %v1139, %v1152
      %v1155 = vpack.i.b16 %v1146, %v1146
      %v1157 = vlaneseq
      %v1158 = vshrl.u32 %v1157, 7
      %v1159 = vsub.s32 0, %v1158
      %v1160 = vrot.slane %v1155, %v1159
      %v1162 = vpack.i.b16 %v1153, %v1153
      %v1164 = vlaneseq
      %v1165 = vshrl.u32 %v1164, 7
      %v1166 = vsub.s32 0, %v1165
      %v1167 = vrot.slane %v1162, %v1166
      %v1168 = vmul.bf16 %v1128, %v1160
      %v1169 = vmul.bf16 %v1124, %v1167
      %v1172 = vunpack.c.l.b16 %v1168
      %v1173 = vunpack.c.l.b16 %v1169
      %v1174 = vunpack.c.h.b16 %v1168
      %v1175 = vunpack.c.h.b16 %v1169
      %v1176 = vpack.c.b16 %v1173, %v1172
      %v1177 = vpack.c.b16 %v1175, %v1174
      %1180 = vst [vmem:[#allocation3 + $0x20] sm:$0xff] %v1176
      %1181 = vst [vmem:[#allocation3 + $0x28] sm:$0xff] %v1177
      %1182 = vrot.lane.b32.xlu0 %v993, 1
      %v1183 = vpop.permute.xlu0 %1182
      %1184 = vrot.lane.b32.xlu0 %v992, 1
      %v1185 = vpop.permute.xlu0 %1184
      %v1186 = vsel %vm405, %v1185, %v1183
      %v1190 = vsel %vm408, %v1183, %v1185
      %v1192 = vld [vmem:[%s413] sm:$0x3]
      %v1195 = vunpack.c.l.s4 1966171168
      %v1196 = vunpack.c.0.s8 %v1195
      %v1197 = vlaneseq
      %v1198 = vshrl.u32 %v1197, 7
      %v1199 = vsub.s32 %v1196, %v1198
      %v1200 = vrot.slane %v1192, %v1199
      %v1201 = vcombine.high %v1200, %v1200
      %v1203 = vunpack.c.l.s4 1966171168
      %v1204 = vunpack.c.0.s8 %v1203
      %v1205 = vlaneseq
      %v1206 = vshrl.u32 %v1205, 7
      %v1207 = vsub.s32 %v1204, %v1206
      %v1208 = vrot.slane %v1200, %v1207
      %v1210 = vunpack.c.l.s4 1966171168
      %v1211 = vunpack.c.0.s8 %v1210
      %v1212 = vlaneseq
      %v1213 = vshrl.u32 %v1212, 7
      %v1214 = vsub.s32 %v1211, %v1213
      %v1215 = vrot.slane %v1201, %v1214
      %v1217 = vpack.i.b16 %v1208, %v1208
      %v1219 = vlaneseq
      %v1220 = vshrl.u32 %v1219, 7
      %v1221 = vsub.s32 0, %v1220
      %v1222 = vrot.slane %v1217, %v1221
      %v1224 = vpack.i.b16 %v1215, %v1215
      %v1226 = vlaneseq
      %v1227 = vshrl.u32 %v1226, 7
      %v1228 = vsub.s32 0, %v1227
      %v1229 = vrot.slane %v1224, %v1228
      %v1230 = vmul.bf16 %v1190, %v1222
      %v1231 = vmul.bf16 %v1186, %v1229
      %v1234 = vunpack.c.l.b16 %v1230
      %v1235 = vunpack.c.l.b16 %v1231
      %v1236 = vunpack.c.h.b16 %v1230
      %v1237 = vunpack.c.h.b16 %v1231
      %v1238 = vpack.c.b16 %v1235, %v1234
      %v1239 = vpack.c.b16 %v1237, %v1236
      %1242 = vst [vmem:[#allocation3 + $0x30] sm:$0xff] %v1238
      %1243 = vst [vmem:[#allocation3 + $0x38] sm:$0xff] %v1239
      %v1244 = vld [vmem:[%s466] sm:$0x3]
      %v1247 = vunpack.c.l.s4 1966171168
      %v1248 = vunpack.c.0.s8 %v1247
      %v1249 = vlaneseq
      %v1250 = vshrl.u32 %v1249, 7
      %v1251 = vsub.s32 %v1248, %v1250
      %v1252 = vrot.slane %v1244, %v1251
      %v1253 = vcombine.high %v1252, %v1252
      %v1255 = vunpack.c.l.s4 1966171168
      %v1256 = vunpack.c.0.s8 %v1255
      %v1257 = vlaneseq
      %v1258 = vshrl.u32 %v1257, 7
      %v1259 = vsub.s32 %v1256, %v1258
      %v1260 = vrot.slane %v1252, %v1259
      %v1262 = vunpack.c.l.s4 1966171168
      %v1263 = vunpack.c.0.s8 %v1262
      %v1264 = vlaneseq
      %v1265 = vshrl.u32 %v1264, 7
      %v1266 = vsub.s32 %v1263, %v1265
      %v1267 = vrot.slane %v1253, %v1266
      %v1269 = vpack.i.b16 %v1260, %v1260
      %v1271 = vlaneseq
      %v1272 = vshrl.u32 %v1271, 7
      %v1273 = vsub.s32 0, %v1272
      %v1274 = vrot.slane %v1269, %v1273
      %v1276 = vpack.i.b16 %v1267, %v1267
      %v1278 = vlaneseq
      %v1279 = vshrl.u32 %v1278, 7
      %v1280 = vsub.s32 0, %v1279
      %v1281 = vrot.slane %v1276, %v1280
      %v1282 = vmul.bf16 %v992, %v1274
      %v1283 = vmul.bf16 %v993, %v1281
      %v1286 = vunpack.c.l.b16 %v1282
      %v1287 = vunpack.c.l.b16 %v1283
      %v1288 = vunpack.c.h.b16 %v1282
      %v1289 = vunpack.c.h.b16 %v1283
      %v1290 = vpack.c.b16 %v1287, %v1286
      %v1291 = vpack.c.b16 %v1289, %v1288
      %1294 = vst [vmem:[#allocation3 + $0x40] sm:$0xff] %v1290
      %1295 = vst [vmem:[#allocation3 + $0x48] sm:$0xff] %v1291
      %1296 = vrot.lane.b32.xlu0 %v992, 127
      %v1297 = vpop.permute.xlu0 %1296
      %1298 = vrot.lane.b32.xlu0 %v993, 127
      %v1299 = vpop.permute.xlu0 %1298
      %v1300 = vsel %vm523, %v1297, %v1299
      %v1304 = vsel %vm526, %v1299, %v1297
      %v1306 = vld [vmem:[%s531] sm:$0x3]
      %v1309 = vunpack.c.l.s4 1966171168
      %v1310 = vunpack.c.0.s8 %v1309
      %v1311 = vlaneseq
      %v1312 = vshrl.u32 %v1311, 7
      %v1313 = vsub.s32 %v1310, %v1312
      %v1314 = vrot.slane %v1306, %v1313
      %v1315 = vcombine.high %v1314, %v1314
      %v1317 = vunpack.c.l.s4 1966171168
      %v1318 = vunpack.c.0.s8 %v1317
      %v1319 = vlaneseq
      %v1320 = vshrl.u32 %v1319, 7
      %v1321 = vsub.s32 %v1318, %v1320
      %v1322 = vrot.slane %v1314, %v1321
      %v1324 = vunpack.c.l.s4 1966171168
      %v1325 = vunpack.c.0.s8 %v1324
      %v1326 = vlaneseq
      %v1327 = vshrl.u32 %v1326, 7
      %v1328 = vsub.s32 %v1325, %v1327
      %v1329 = vrot.slane %v1315, %v1328
      %v1331 = vpack.i.b16 %v1322, %v1322
      %v1333 = vlaneseq
      %v1334 = vshrl.u32 %v1333, 7
      %v1335 = vsub.s32 0, %v1334
      %v1336 = vrot.slane %v1331, %v1335
      %v1338 = vpack.i.b16 %v1329, %v1329
      %v1340 = vlaneseq
      %v1341 = vshrl.u32 %v1340, 7
      %v1342 = vsub.s32 0, %v1341
      %v1343 = vrot.slane %v1338, %v1342
      %v1344 = vmul.bf16 %v1300, %v1336
      %v1345 = vmul.bf16 %v1304, %v1343
      %v1348 = vunpack.c.l.b16 %v1344
      %v1349 = vunpack.c.l.b16 %v1345
      %v1350 = vunpack.c.h.b16 %v1344
      %v1351 = vunpack.c.h.b16 %v1345
      %v1352 = vpack.c.b16 %v1349, %v1348
      %v1353 = vpack.c.b16 %v1351, %v1350
      %1356 = vst [vmem:[#allocation3 + $0x50] sm:$0xff] %v1352
      %1357 = vst [vmem:[#allocation3 + $0x58] sm:$0xff] %v1353
      %1358 = vrot.lane.b32.xlu0 %v992, 113
      %v1359 = vpop.permute.xlu0 %1358
      %1360 = vrot.lane.b32.xlu0 %v993, 113
      %v1361 = vpop.permute.xlu0 %1360
      %v1362 = vsel %vm588, %v1359, %v1361
      %v1366 = vsel %vm591, %v1361, %v1359
      %v1368 = vld [vmem:[%s596] sm:$0x3]
      %v1371 = vunpack.c.l.s4 1966171168
      %v1372 = vunpack.c.0.s8 %v1371
      %v1373 = vlaneseq
      %v1374 = vshrl.u32 %v1373, 7
      %v1375 = vsub.s32 %v1372, %v1374
      %v1376 = vrot.slane %v1368, %v1375
      %v1377 = vcombine.high %v1376, %v1376
      %v1379 = vunpack.c.l.s4 1966171168
      %v1380 = vunpack.c.0.s8 %v1379
      %v1381 = vlaneseq
      %v1382 = vshrl.u32 %v1381, 7
      %v1383 = vsub.s32 %v1380, %v1382
      %v1384 = vrot.slane %v1376, %v1383
      %v1386 = vunpack.c.l.s4 1966171168
      %v1387 = vunpack.c.0.s8 %v1386
      %v1388 = vlaneseq
      %v1389 = vshrl.u32 %v1388, 7
      %v1390 = vsub.s32 %v1387, %v1389
      %v1391 = vrot.slane %v1377, %v1390
      %v1393 = vpack.i.b16 %v1384, %v1384
      %v1395 = vlaneseq
      %v1396 = vshrl.u32 %v1395, 7
      %v1397 = vsub.s32 0, %v1396
      %v1398 = vrot.slane %v1393, %v1397
      %v1400 = vpack.i.b16 %v1391, %v1391
      %v1402 = vlaneseq
      %v1403 = vshrl.u32 %v1402, 7
      %v1404 = vsub.s32 0, %v1403
      %v1405 = vrot.slane %v1400, %v1404
      %v1406 = vmul.bf16 %v1362, %v1398
      %v1407 = vmul.bf16 %v1366, %v1405
      %v1410 = vunpack.c.l.b16 %v1406
      %v1411 = vunpack.c.l.b16 %v1407
      %v1412 = vunpack.c.h.b16 %v1406
      %v1413 = vunpack.c.h.b16 %v1407
      %v1414 = vpack.c.b16 %v1411, %v1410
      %v1415 = vpack.c.b16 %v1413, %v1412
      %1418 = vst [vmem:[#allocation3 + $0x60] sm:$0xff] %v1414
      %1419 = vst [vmem:[#allocation3 + $0x68] sm:$0xff] %v1415
      %1420 = vrot.lane.b32.xlu0 %v992, 112
      %v1421 = vpop.permute.xlu0 %1420
      %1422 = vrot.lane.b32.xlu0 %v993, 112
      %v1423 = vpop.permute.xlu0 %1422
      %v1424 = vsel %vm653, %v1421, %v1423
      %v1428 = vsel %vm656, %v1423, %v1421
      %v1430 = vld [vmem:[%s661] sm:$0x3]
      %v1433 = vunpack.c.l.s4 1966171168
      %v1434 = vunpack.c.0.s8 %v1433
      %v1435 = vlaneseq
      %v1436 = vshrl.u32 %v1435, 7
      %v1437 = vsub.s32 %v1434, %v1436
      %v1438 = vrot.slane %v1430, %v1437
      %v1439 = vcombine.high %v1438, %v1438
      %v1441 = vunpack.c.l.s4 1966171168
      %v1442 = vunpack.c.0.s8 %v1441
      %v1443 = vlaneseq
      %v1444 = vshrl.u32 %v1443, 7
      %v1445 = vsub.s32 %v1442, %v1444
      %v1446 = vrot.slane %v1438, %v1445
      %v1448 = vunpack.c.l.s4 1966171168
      %v1449 = vunpack.c.0.s8 %v1448
      %v1450 = vlaneseq
      %v1451 = vshrl.u32 %v1450, 7
      %v1452 = vsub.s32 %v1449, %v1451
      %v1453 = vrot.slane %v1439, %v1452
      %v1455 = vpack.i.b16 %v1446, %v1446
      %v1457 = vlaneseq
      %v1458 = vshrl.u32 %v1457, 7
      %v1459 = vsub.s32 0, %v1458
      %v1460 = vrot.slane %v1455, %v1459
      %v1462 = vpack.i.b16 %v1453, %v1453
      %v1464 = vlaneseq
      %v1465 = vshrl.u32 %v1464, 7
      %v1466 = vsub.s32 0, %v1465
      %v1467 = vrot.slane %v1462, %v1466
      %v1468 = vmul.bf16 %v1424, %v1460
      %v1469 = vmul.bf16 %v1428, %v1467
      %v1472 = vunpack.c.l.b16 %v1468
      %v1473 = vunpack.c.l.b16 %v1469
      %v1474 = vunpack.c.h.b16 %v1468
      %v1475 = vunpack.c.h.b16 %v1469
      %v1476 = vpack.c.b16 %v1473, %v1472
      %v1477 = vpack.c.b16 %v1475, %v1474
      %1480 = vst [vmem:[#allocation3 + $0x70] sm:$0xff] %v1476
      %1481 = vst [vmem:[#allocation3 + $0x78] sm:$0xff] %v1477
      %1482 = vrot.lane.b32.xlu0 %v992, 111
      %v1483 = vpop.permute.xlu0 %1482
      %1484 = vrot.lane.b32.xlu0 %v993, 111
      %v1485 = vpop.permute.xlu0 %1484
      %v1486 = vsel %vm718, %v1483, %v1485
      %v1490 = vsel %vm721, %v1485, %v1483
      %v1492 = vld [vmem:[%s726] sm:$0x3]
      %v1495 = vunpack.c.l.s4 1966171168
      %v1496 = vunpack.c.0.s8 %v1495
      %v1497 = vlaneseq
      %v1498 = vshrl.u32 %v1497, 7
      %v1499 = vsub.s32 %v1496, %v1498
      %v1500 = vrot.slane %v1492, %v1499
      %v1501 = vcombine.high %v1500, %v1500
      %v1503 = vunpack.c.l.s4 1966171168
      %v1504 = vunpack.c.0.s8 %v1503
      %v1505 = vlaneseq
      %v1506 = vshrl.u32 %v1505, 7
      %v1507 = vsub.s32 %v1504, %v1506
      %v1508 = vrot.slane %v1500, %v1507
      %v1510 = vunpack.c.l.s4 1966171168
      %v1511 = vunpack.c.0.s8 %v1510
      %v1512 = vlaneseq
      %v1513 = vshrl.u32 %v1512, 7
      %v1514 = vsub.s32 %v1511, %v1513
      %v1515 = vrot.slane %v1501, %v1514
      %v1517 = vpack.i.b16 %v1508, %v1508
      %v1519 = vlaneseq
      %v1520 = vshrl.u32 %v1519, 7
      %v1521 = vsub.s32 0, %v1520
      %v1522 = vrot.slane %v1517, %v1521
      %v1524 = vpack.i.b16 %v1515, %v1515
      %v1526 = vlaneseq
      %v1527 = vshrl.u32 %v1526, 7
      %v1528 = vsub.s32 0, %v1527
      %v1529 = vrot.slane %v1524, %v1528
      %v1530 = vmul.bf16 %v1486, %v1522
      %v1531 = vmul.bf16 %v1490, %v1529
      %v1534 = vunpack.c.l.b16 %v1530
      %v1535 = vunpack.c.l.b16 %v1531
      %v1536 = vunpack.c.h.b16 %v1530
      %v1537 = vunpack.c.h.b16 %v1531
      %v1538 = vpack.c.b16 %v1535, %v1534
      %v1539 = vpack.c.b16 %v1537, %v1536
      %1542 = vst [vmem:[#allocation3 + $0x80] sm:$0xff] %v1538
      %1543 = vst [vmem:[#allocation3 + $0x88] sm:$0xff] %v1539
      %v1544 = vld [vmem:[%s2] sm:$0xff]
      %v1545 = vld [vmem:[%s2 + $0x8] sm:$0xff]
      %v1546 = vld [vmem:[#allocation3] sm:$0xff]
      %v1547 = vld [vmem:[#allocation3 + $0x8] sm:$0xff]
      %v1548 = vld [vmem:[#allocation3 + $0x10] sm:$0xff]
      %v1549 = vld [vmem:[#allocation3 + $0x18] sm:$0xff]
      %v1550 = vld [vmem:[#allocation3 + $0x20] sm:$0xff]
      %v1551 = vld [vmem:[#allocation3 + $0x28] sm:$0xff]
      %v1552 = vld [vmem:[#allocation3 + $0x30] sm:$0xff]
      %v1553 = vld [vmem:[#allocation3 + $0x38] sm:$0xff]
      %v1554 = vld [vmem:[#allocation3 + $0x40] sm:$0xff]
      %v1555 = vld [vmem:[#allocation3 + $0x48] sm:$0xff]
      %v1556 = vld [vmem:[#allocation3 + $0x50] sm:$0xff]
      %v1557 = vld [vmem:[#allocation3 + $0x58] sm:$0xff]
      %v1558 = vld [vmem:[#allocation3 + $0x60] sm:$0xff]
      %v1559 = vld [vmem:[#allocation3 + $0x68] sm:$0xff]
      %v1560 = vld [vmem:[#allocation3 + $0x70] sm:$0xff]
      %v1561 = vld [vmem:[#allocation3 + $0x78] sm:$0xff]
      %v1562 = vld [vmem:[#allocation3 + $0x80] sm:$0xff]
      %v1563 = vld [vmem:[#allocation3 + $0x88] sm:$0xff]
      %v1566 = vunpack.c.l.b16 %v1544
      %v1567 = vunpack.c.h.b16 %v1544
      %v1568 = vunpack.c.l.b16 %v1545
      %v1569 = vunpack.c.h.b16 %v1545
      %v1570 = vpack.c.b16 %v1568, %v1566
      %v1571 = vpack.c.b16 %v1569, %v1567
      %v1591 = vunpack.c.l.b16 %v1546
      %v1592 = vunpack.c.h.b16 %v1546
      %v1593 = vunpack.c.l.b16 %v1547
      %v1594 = vunpack.c.h.b16 %v1547
      %v1595 = vunpack.c.l.b16 %v1548
      %v1596 = vunpack.c.h.b16 %v1548
      %v1597 = vunpack.c.l.b16 %v1549
      %v1598 = vunpack.c.h.b16 %v1549
      %v1599 = vunpack.c.l.b16 %v1550
      %v1600 = vunpack.c.h.b16 %v1550
      %v1601 = vunpack.c.l.b16 %v1551
      %v1602 = vunpack.c.h.b16 %v1551
      %v1603 = vunpack.c.l.b16 %v1552
      %v1604 = vunpack.c.h.b16 %v1552
      %v1605 = vunpack.c.l.b16 %v1553
      %v1606 = vunpack.c.h.b16 %v1553
      %v1607 = vunpack.c.l.b16 %v1554
      %v1608 = vunpack.c.h.b16 %v1554
      %v1609 = vunpack.c.l.b16 %v1555
      %v1610 = vunpack.c.h.b16 %v1555
      %v1611 = vunpack.c.l.b16 %v1556
      %v1612 = vunpack.c.h.b16 %v1556
      %v1613 = vunpack.c.l.b16 %v1557
      %v1614 = vunpack.c.h.b16 %v1557
      %v1615 = vunpack.c.l.b16 %v1558
      %v1616 = vunpack.c.h.b16 %v1558
      %v1617 = vunpack.c.l.b16 %v1559
      %v1618 = vunpack.c.h.b16 %v1559
      %v1619 = vunpack.c.l.b16 %v1560
      %v1620 = vunpack.c.h.b16 %v1560
      %v1621 = vunpack.c.l.b16 %v1561
      %v1622 = vunpack.c.h.b16 %v1561
      %v1623 = vunpack.c.l.b16 %v1562
      %v1624 = vunpack.c.h.b16 %v1562
      %v1625 = vunpack.c.l.b16 %v1563
      %v1626 = vunpack.c.h.b16 %v1563
      %v1627 = vpack.c.b16 %v1593, %v1591
      %v1628 = vpack.c.b16 %v1594, %v1592
      %v1629 = vpack.c.b16 %v1597, %v1595
      %v1630 = vpack.c.b16 %v1598, %v1596
      %v1631 = vpack.c.b16 %v1601, %v1599
      %v1632 = vpack.c.b16 %v1602, %v1600
      %v1633 = vpack.c.b16 %v1605, %v1603
      %v1634 = vpack.c.b16 %v1606, %v1604
      %v1635 = vpack.c.b16 %v1609, %v1607
      %v1636 = vpack.c.b16 %v1610, %v1608
      %v1637 = vpack.c.b16 %v1613, %v1611
      %v1638 = vpack.c.b16 %v1614, %v1612
      %v1639 = vpack.c.b16 %v1617, %v1615
      %v1640 = vpack.c.b16 %v1618, %v1616
      %v1641 = vpack.c.b16 %v1621, %v1619
      %v1642 = vpack.c.b16 %v1622, %v1620
      %v1643 = vpack.c.b16 %v1625, %v1623
      %v1644 = vpack.c.b16 %v1626, %v1624
      %v1664 = vsel %vm278, %v1571, 0
      %1666 = vmatprep.subr.bf16.mxu0 %v1642
      %1667 = vmatpush1.bf16.msra.mxu0 %v1641
      %1668 = vmatprep.subr.bf16.mxu0 %v1640
      %1669 = vmatpush1.bf16.msra.mxu0 %v1639
      %1670 = vmatprep.subr.bf16.mxu0 %v1638
      %1671 = vmatpush1.bf16.msra.mxu0 %v1637
      %1672 = vmatprep.subr.bf16.mxu0 %v1636
      %1673 = vmatpush1.bf16.msra.mxu0 %v1635
      %1674 = vmatprep.subr.bf16.mxu0 %v1634
      %1675 = vmatpush1.bf16.msra.mxu0 %v1633
      %1676 = vmatprep.subr.bf16.mxu0 %v1632
      %1677 = vmatpush1.bf16.msra.mxu0 %v1631
      %1678 = vmatprep.subr.bf16.mxu0 %v1630
      %1679 = vmatpush1.bf16.msra.mxu0 %v1629
      %1680 = vmatprep.subr.bf16.mxu0 %v1628
      %1681 = vmatpush1.bf16.msra.mxu0 %v1627
      %1682 = vmatprep.subr.bf16.mxu0 0
      %1683 = vmatpush2.bf16.msra.mxu0 0
      %1684 = vmatprep.subr.bf16.mxu0 0
      %1685 = vmatpush2.bf16.msra.mxu0 0
      %1686 = vmatprep.subr.bf16.mxu0 0
      %1687 = vmatpush2.bf16.msra.mxu0 0
      %1688 = vmatprep.subr.bf16.mxu0 0
      %1689 = vmatpush2.bf16.msra.mxu0 0
      %1690 = vmatprep.subr.bf16.mxu0 0
      %1691 = vmatpush2.bf16.msra.mxu0 0
      %1692 = vmatprep.subr.bf16.mxu0 0
      %1693 = vmatpush2.bf16.msra.mxu0 0
      %1694 = vmatprep.subr.bf16.mxu0 0
      %1695 = vmatpush2.bf16.msra.mxu0 0
      %1696 = vmatprep.subr.bf16.mxu0 %v1644
      %1697 = vmatpush2.bf16.msra.mxu0 %v1643
      %1698 = vmatprep.mubr.bf16.mxu0 %v1664
      %1699 = vmatmul.mubr.bf16.gmra.mxu0 %v1570
      %v1700 = vpop.f32.mrf.mxu0
      %v1701 = vadd.f32 0.0, %v1700
      %v1702 = vpop.f32.mrf.mxu0
      %v1703 = vadd.f32 0.0, %v1702
      %v1704 = vpop.f32.mrf.mxu0
      %v1705 = vadd.f32 0.0, %v1704
      %v1706 = vpop.f32.mrf.mxu0
      %v1707 = vadd.f32 0.0, %v1706
      %1708 = vdwg.mxu0
      %v1709 = vadd.f32 %v1701, %v1703
      %1710 = vadd.xlane.f32.xlu0 %v1709
      %v1711 = vpop.xlane.xlu0 %1710
      %v1712 = vadd.f32 %v1705, %v1707
      %1713 = vadd.xlane.f32.xlu0 %v1712
      %v1714 = vpop.xlane.xlu0 %1713
      %v1715 = vmul.f32 %v1701, %v1701
      %v1716 = vmul.f32 %v1703, %v1703
      %v1717 = vmul.f32 %v1705, %v1705
      %v1718 = vmul.f32 %v1707, %v1707
      %v1719 = vadd.f32 %v1715, %v1716
      %1720 = vadd.xlane.f32.xlu0 %v1719
      %v1721 = vpop.xlane.xlu0 %1720
      %v1722 = vadd.f32 %v1717, %v1718
      %1723 = vadd.xlane.f32.xlu0 %v1722
      %v1724 = vpop.xlane.xlu0 %1723
      %v1725 = vmul.f32 %v1711, 0.00390625
      %v1726 = vmul.f32 %v1714, 0.00390625
      %v1727 = vmul.f32 %v1721, 0.00390625
      %v1728 = vmul.f32 %v1724, 0.00390625
      %v1729 = vmul.f32 %v1725, %v1725
      %v1730 = vmul.f32 %v1726, %v1726
      %v1731 = vsub.f32 %v1727, %v1729
      %v1732 = vsub.f32 %v1728, %v1730
      %v1733 = vsub.f32 %v1701, %v1725
      %v1734 = vsub.f32 %v1703, %v1725
      %v1735 = vsub.f32 %v1705, %v1726
      %v1736 = vsub.f32 %v1707, %v1726
      %v1737 = vadd.f32 %v1731, 1e-05
      %v1738 = vadd.f32 %v1732, 1e-05
      %v1739 = vrsqrt.pop %v1737
      %v1740 = vrsqrt.pop %v1738
      %v1741 = vmul.f32 %v1733, %v1739
      %v1742 = vmul.f32 %v1734, %v1739
      %v1743 = vmul.f32 %v1735, %v1740
      %v1744 = vmul.f32 %v1736, %v1740
      %vm1745 = vcmp.ge.f32.partialorder %v1741, 0.0
      %vm1746 = vcmp.ge.f32.partialorder %v1742, 0.0
      %vm1747 = vcmp.ge.f32.partialorder %v1743, 0.0
      %vm1748 = vcmp.ge.f32.partialorder %v1744, 0.0
      %v1749 = vmul.f32 %v1741, 0.01
      %v1750 = vmul.f32 %v1742, 0.01
      %v1751 = vmul.f32 %v1743, 0.01
      %v1752 = vmul.f32 %v1744, 0.01
      %v1753 = vsel %vm1745, %v1741, %v1749
      %v1754 = vsel %vm1746, %v1742, %v1750
      %v1755 = vsel %vm1747, %v1743, %v1751
      %v1756 = vsel %vm1748, %v1744, %v1752
      %1757 = vst [vmem:[%s197] sm:$0xff] %v1753
      %1758 = vst [vmem:[%s197 + $0x8] sm:$0xff] %v1754
      %1759 = vst [vmem:[%s197 + $0x10] sm:$0xff] %v1755
      %1760 = vst [vmem:[%s197 + $0x18] sm:$0xff] %v1756
      %p1761 = scmp.lt.s32.totalorder %s15, 1
      %s1762 = scalar_select %p1761, %s15, 1
      %s1763 = smul.addr %s1762, 4
      %s1764 = smul.addr %s1763, 8
      %s1765 = scalar_lea.vmem %s4, %s1764
      // Predicated region
      $region37: #{_lambda_.1} parent=35 // pred_check
        %p1766 = pneg %p122
      $region38: #{_lambda_.1} parent=35 // pred_check_branch
        %1768 = sbr.rel (%p1766) target = $region40
      $region39: #{_lambda_.1} parent=35 // pred_region
        _
      $region40: #{_lambda_.1} parent=35 // pred_fallthru
        _
    $region36: #{_lambda_.1} parent=5 // pred_fallthru
      _
    %p1769 = scmp.le.s32.totalorder 2, %s10
    // Predicated region
    $region41: #{_lambda_.1} parent=5 // pred_check
      %p1770 = pneg %p1769
    $region42: #{_lambda_.1} parent=5 // pred_check_branch
      %1772 = sbr.rel (%p1770) target = $region44
    $region43: #{_lambda_.1} parent=5 // pred_region
      %s1773 = ssub.s32 %s10, 2
      // Predicated region
      $region45: #{_lambda_.1} parent=43 // pred_check
        %p1774 = pneg %p128
      $region46: #{_lambda_.1} parent=43 // pred_check_branch
        %1776 = sbr.rel (%p1774) target = $region48
      $region47: #{_lambda_.1} parent=43 // pred_region
        %p1777 = scmp.lt.s32.totalorder %s16, 1
        %s1778 = scalar_select %p1777, %s16, 1
        %s1779 = smul.addr %s1778, 4
        %s1780 = smul.addr %s1779, 8
        %s1781 = scalar_lea.vmem %s4, %s1780
      $region48: #{_lambda_.1} parent=43 // pred_fallthru
        _
    $region44: #{_lambda_.1} parent=5 // pred_fallthru
      _
  $region6: #{_lambda_.1} parent=0 // loop_footer
    %s14 = sadd.s32 1, %s10
  $region7: #{_lambda_.1} parent=0 // loop_footer_branch
    %9 = sbr.rel target = $region3
  $region8: #{_lambda_.1} parent=0 // loop_exit
    _

</llo_original>
